<compile_context>
chip_gen: v6e
topology: v6e:2x2x1
jax: 0.10.0
libtpu: 0.0.40
codegen_flags: <defaults>
</compile_context>

<pallas_src>
import functools

import numpy as np
import jax
import jax.numpy as jnp
from jax.experimental import pallas as pl
from jax.experimental.pallas import tpu as pltpu


# ------------------------------- fused kernel --------------------------------

def _mhsa_fused_kernel(x_ref, wqkv_ref, bqkv_ref, wo_ref, bo_ref,
                       rep_ref, cmask_ref, ggt_ref, hmask_ref, summat_ref,
                       o_ref):
    # x_ref:    (1, S, E)   one batch element per grid step
    # wqkv_ref: (E, 3E)     [Wq*scale | Wk | Wv]
    # bqkv_ref: (1, 3E)     [bq*scale | bk | bv]
    # wo_ref:   (E, E)      output projection (W_o^T)
    # bo_ref:   (1, E)
    # rep_ref:  (M, S)      Rep[m, s]    = [s == m // H]        (M = S * H)
    # cmask_ref:(M, E)      cmask[m, e]  = [e // D == m % H]
    # ggt_ref:  (E, E)      GGt[f, e]    = [f % D == e % D]
    # hmask_ref:(M, M)      0 within a head (m//S == n//S), -1e30 elsewhere
    # summat_ref:(S, M)     SumMat[s, m] = [m // H == s]
    # o_ref:    (1, S, E)   lane-dense output slab
    E = x_ref.shape[2]
    f32 = jnp.float32

    x = x_ref[0]                                                     # (S, E)

    # ---- fused QKV projection: one lane-dense matmul (scale pre-folded) ----
    qkv = jnp.dot(x, wqkv_ref[...], preferred_element_type=f32) + bqkv_ref[...]   # (S, 3E)

    # ---- flat per-head layout via constant 0/1 matmuls (no reshape) --------
    # flat row m corresponds to sequence row m // H and lane chunk m % H.
    qkv_rep = jnp.dot(rep_ref[...], qkv, preferred_element_type=f32)              # (M, 3E)

    cmask = cmask_ref[...]                                           # (M, E)
    q_m = qkv_rep[:, 0:E] * cmask        # 128-aligned lane slices of the value
    k_m = qkv_rep[:, E:2 * E] * cmask
    v_m = qkv_rep[:, 2 * E:3 * E] * cmask

    # ---- all heads at once: block-diagonal masked softmax attention --------
    # q_al[m, e] = q_head[m, e mod D]  (chunk-aligned / lane-tiled copy of q)
    ggt = ggt_ref[...]
    q_al = jnp.dot(q_m, ggt, preferred_element_type=f32)             # (M, E)
    scores = jax.lax.dot_general(q_al, k_m, (((1,), (1,)), ((), ())),
                                 preferred_element_type=f32)         # (M, M)
    scores = scores + hmask_ref[...]                                 # off-head -> -1e30

    smax = jnp.max(scores, axis=-1, keepdims=True)
    p = jnp.exp(scores - smax)
    p = p / jnp.sum(p, axis=-1, keepdims=True)                       # exact softmax

    # ---- attention output in lane-tiled form, then dense merge + W_o -------
    v_al = jnp.dot(v_m, ggt, preferred_element_type=f32)             # (M, E) tiled v
    attn_tiled = jnp.dot(p, v_al, preferred_element_type=f32)        # (M, E)
    merged = jnp.dot(summat_ref[...], attn_tiled * cmask,
                     preferred_element_type=f32)                     # (S, E)
    o_ref[0] = jnp.dot(merged, wo_ref[...],
                       preferred_element_type=f32) + bo_ref[...]     # (S, E) store


# ------------------------------- module wrapper -------------------------------

@functools.partial(jax.jit, static_argnums=(2,))
def multi_head_self_attention(x, params, num_heads):
    """Forward pass of MultiHeadSelfAttention as ONE fused Pallas kernel."""
    B, S, E = x.shape
    H = num_heads
    D = E // H
    M = S * H
    scale = 1.0 / (D ** 0.5)

    # ---- host-side weight prep (constant under jit) --------------------------
    wqkv = jnp.concatenate(
        [params["wq_t"] * scale, params["wk_t"], params["wv_t"]], axis=1)      # (E, 3E)
    bqkv = jnp.concatenate(
        [params["bq"] * scale, params["bk"], params["bv"]]).reshape(1, 3 * E)  # (1, 3E)
    wo = params["wo_t"]                                                        # (E, E)
    bo = params["bo"].reshape(1, E)

    # ---- constant selection / mask matrices (built once, DMA'd once) ---------
    m_idx = np.arange(M)
    rep = (m_idx[:, None] // H == np.arange(S)[None, :]).astype(np.float32)    # (M, S)
    summat = (m_idx[None, :] // H == np.arange(S)[:, None]).astype(np.float32) # (S, M)
    cmask = (np.arange(E)[None, :] // D == (m_idx[:, None] % H)).astype(np.float32)   # (M, E)
    ggt = (np.arange(E)[:, None] % D == np.arange(E)[None, :] % D).astype(np.float32) # (E, E)
    hmask = np.where(m_idx[:, None] // S == m_idx[None, :] // S,
                     0.0, -1e30).astype(np.float32)                            # (M, M)

    c2 = lambda b: (0, 0)   # constants: block index never changes -> fetched once

    return pl.pallas_call(
        _mhsa_fused_kernel,
        out_shape=jax.ShapeDtypeStruct((B, S, E), jnp.float32),
        grid_spec=pltpu.PrefetchScalarGridSpec(
            num_scalar_prefetch=0,
            grid=(B,),
            in_specs=[
                pl.BlockSpec((1, S, E), lambda b: (b, 0, 0)),   # x
                pl.BlockSpec((E, 3 * E), c2),                   # wqkv
                pl.BlockSpec((1, 3 * E), c2),                   # bqkv
                pl.BlockSpec((E, E), c2),                       # wo
                pl.BlockSpec((1, E), c2),                       # bo
                pl.BlockSpec((M, S), c2),                       # rep
                pl.BlockSpec((M, E), c2),                       # chunk mask
                pl.BlockSpec((E, E), c2),                       # ggt
                pl.BlockSpec((M, M), c2),                       # head mask
                pl.BlockSpec((S, M), c2),                       # summat
            ],
            out_specs=pl.BlockSpec((1, S, E), lambda b: (b, 0, 0)),
        ),
        compiler_params=pltpu.CompilerParams(
            dimension_semantics=("parallel",)),   # v7x: shard batches across TCs
    )(x, wqkv, bqkv, wo, bo,
      jnp.asarray(rep), jnp.asarray(cmask), jnp.asarray(ggt),
      jnp.asarray(hmask), jnp.asarray(summat))


# ------------------------------ pure-JAX reference ----------------------------

def ref_mhsa(x, params, num_heads):
    B, S, E = x.shape
    D = E // num_heads
    hi = jax.lax.Precision.HIGHEST
    lin = lambda a, wt, b: jnp.dot(a, wt, precision=hi) + b
    # NOTE: reshape WITHOUT transpose, matching the PyTorch .view(B, H, -1, D).
    Q = lin(x, params["wq_t"], params["bq"]).reshape(B, num_heads, S, D)
    K = lin(x, params["wk_t"], params["bk"]).reshape(B, num_heads, S, D)
    V = lin(x, params["wv_t"], params["bv"]).reshape(B, num_heads, S, D)
    scores = jnp.einsum("bhqd,bhkd->bhqk", Q, K, precision=hi) / (D ** 0.5)
    w = jax.nn.softmax(scores, axis=-1)
    out = jnp.einsum("bhqk,bhkd->bhqd", w, V, precision=hi).reshape(B, S, E)
    return lin(out, params["wo_t"], params["bo"])


# ------------------------------------ main ------------------------------------

if __name__ == "__main__":
    # shapes implied by the module's surrounding script
    B, S, E, H = 2, 10, 128, 8

    key = jax.random.PRNGKey(0)
    k_x, k_q, k_k, k_v, k_o, k_bq, k_bk, k_bv, k_bo = jax.random.split(key, 9)

    # deterministic synthetic parameters (stored as W.T, shape (E_in, E_out))
    scale = 1.0 / np.sqrt(E)
    params = {
        "wq_t": jax.random.uniform(k_q, (E, E), jnp.float32, -scale, scale),
        "wk_t": jax.random.uniform(k_k, (E, E), jnp.float32, -scale, scale),
        "wv_t": jax.random.uniform(k_v, (E, E), jnp.float32, -scale, scale),
        "wo_t": jax.random.uniform(k_o, (E, E), jnp.float32, -scale, scale),
        "bq": jax.random.uniform(k_bq, (E,), jnp.float32, -scale, scale),
        "bk": jax.random.uniform(k_bk, (E,), jnp.float32, -scale, scale),
        "bv": jax.random.uniform(k_bv, (E,), jnp.float32, -scale, scale),
        "bo": jax.random.uniform(k_bo, (E,), jnp.float32, -scale, scale),
    }

    # synthetic "encoded_input" (embedding + positional encoding stand-in)
    x = jax.random.normal(k_x, (B, S, E), jnp.float32)

    out = multi_head_self_attention(x, params, H)
    out = jax.block_until_ready(out)

    ref = ref_mhsa(x, params, H)
    np.testing.assert_allclose(np.asarray(out), np.asarray(ref),
                               atol=2e-3, rtol=2e-3)

    print("KERNEL_OK")
</pallas_src>

<mosaic_0001>
module attributes {stable_mosaic.version = 11 : i64} {
  func.func @_mhsa_fused_kernel(%arg0: i32, %arg1: memref<1x10x128xf32, #tpu.memory_space<vmem>>, %arg2: memref<128x384xf32, #tpu.memory_space<vmem>>, %arg3: memref<1x384xf32, #tpu.memory_space<vmem>>, %arg4: memref<128x128xf32, #tpu.memory_space<vmem>>, %arg5: memref<1x128xf32, #tpu.memory_space<vmem>>, %arg6: memref<80x10xf32, #tpu.memory_space<vmem>>, %arg7: memref<80x128xf32, #tpu.memory_space<vmem>>, %arg8: memref<128x128xf32, #tpu.memory_space<vmem>>, %arg9: memref<80x80xf32, #tpu.memory_space<vmem>>, %arg10: memref<10x80xf32, #tpu.memory_space<vmem>>, %arg11: memref<1x10x128xf32, #tpu.memory_space<vmem>>) attributes {dimension_semantics = [#tpu.dimension_semantics<parallel>], iteration_bounds = array<i64: 2>, scalar_prefetch = 0 : i64, scratch_operands = 0 : i64, tpu.core_type = #tpu.core_type<tc>, window_params = [{transform_indices = @transform_0, window_bounds = array<i64: 1, 10, 128>}, {pipeline_mode = #tpu.pipeline_mode<synchronous>, transform_indices = @transform_1, window_bounds = array<i64: 128, 384>}, {pipeline_mode = #tpu.pipeline_mode<synchronous>, transform_indices = @transform_2, window_bounds = array<i64: 1, 384>}, {pipeline_mode = #tpu.pipeline_mode<synchronous>, transform_indices = @transform_3, window_bounds = array<i64: 128, 128>}, {pipeline_mode = #tpu.pipeline_mode<synchronous>, transform_indices = @transform_4, window_bounds = array<i64: 1, 128>}, {pipeline_mode = #tpu.pipeline_mode<synchronous>, transform_indices = @transform_5, window_bounds = array<i64: 80, 10>}, {pipeline_mode = #tpu.pipeline_mode<synchronous>, transform_indices = @transform_6, window_bounds = array<i64: 80, 128>}, {pipeline_mode = #tpu.pipeline_mode<synchronous>, transform_indices = @transform_7, window_bounds = array<i64: 128, 128>}, {pipeline_mode = #tpu.pipeline_mode<synchronous>, transform_indices = @transform_8, window_bounds = array<i64: 80, 80>}, {pipeline_mode = #tpu.pipeline_mode<synchronous>, transform_indices = @transform_9, window_bounds = array<i64: 10, 80>}, {transform_indices = @transform_10, window_bounds = array<i64: 1, 10, 128>}]} {
    %c0 = arith.constant 0 : index
    %c0_0 = arith.constant 0 : index
    %c0_1 = arith.constant 0 : index
    %0 = vector.load %arg1[%c0, %c0_0, %c0_1] : memref<1x10x128xf32, #tpu.memory_space<vmem>>, vector<1x10x128xf32>
    %1 = vector.shape_cast %0 : vector<1x10x128xf32> to vector<10x128xf32>
    %c0_2 = arith.constant 0 : index
    %c0_3 = arith.constant 0 : index
    %2 = vector.load %arg2[%c0_2, %c0_3] : memref<128x384xf32, #tpu.memory_space<vmem>>, vector<128x384xf32>
    %cst = arith.constant dense<0.000000e+00> : vector<10x384xf32>
    %3 = tpu.matmul %1, %2, %cst {dimension_numbers = #tpu.dot_dimension_numbers<[1], [0], [0], [1], [0, 0, 1, 1], [], []>} : vector<10x128xf32>, vector<128x384xf32>, vector<10x384xf32> -> vector<10x384xf32>
    %c0_4 = arith.constant 0 : index
    %c0_5 = arith.constant 0 : index
    %4 = vector.load %arg3[%c0_4, %c0_5] : memref<1x384xf32, #tpu.memory_space<vmem>>, vector<1x384xf32>
    %5 = vector.broadcast %4 : vector<1x384xf32> to vector<10x384xf32>
    %6 = arith.addf %3, %5 : vector<10x384xf32>
    %c0_6 = arith.constant 0 : index
    %c0_7 = arith.constant 0 : index
    %7 = vector.load %arg6[%c0_6, %c0_7] : memref<80x10xf32, #tpu.memory_space<vmem>>, vector<80x10xf32>
    %cst_8 = arith.constant dense<0.000000e+00> : vector<80x384xf32>
    %8 = tpu.matmul %7, %6, %cst_8 {dimension_numbers = #tpu.dot_dimension_numbers<[1], [0], [0], [1], [0, 0, 1, 1], [], []>} : vector<80x10xf32>, vector<10x384xf32>, vector<80x384xf32> -> vector<80x384xf32>
    %c0_9 = arith.constant 0 : index
    %c0_10 = arith.constant 0 : index
    %9 = vector.load %arg7[%c0_9, %c0_10] : memref<80x128xf32, #tpu.memory_space<vmem>>, vector<80x128xf32>
    %10 = vector.extract_strided_slice %8 {offsets = [0, 0], sizes = [80, 128], strides = [1, 1]} : vector<80x384xf32> to vector<80x128xf32>
    %11 = arith.mulf %10, %9 : vector<80x128xf32>
    %12 = vector.extract_strided_slice %8 {offsets = [0, 128], sizes = [80, 128], strides = [1, 1]} : vector<80x384xf32> to vector<80x128xf32>
    %13 = arith.mulf %12, %9 : vector<80x128xf32>
    %14 = vector.extract_strided_slice %8 {offsets = [0, 256], sizes = [80, 128], strides = [1, 1]} : vector<80x384xf32> to vector<80x128xf32>
    %15 = arith.mulf %14, %9 : vector<80x128xf32>
    %c0_11 = arith.constant 0 : index
    %c0_12 = arith.constant 0 : index
    %16 = vector.load %arg8[%c0_11, %c0_12] : memref<128x128xf32, #tpu.memory_space<vmem>>, vector<128x128xf32>
    %cst_13 = arith.constant dense<0.000000e+00> : vector<80x128xf32>
    %17 = tpu.matmul %11, %16, %cst_13 {dimension_numbers = #tpu.dot_dimension_numbers<[1], [0], [0], [1], [0, 0, 1, 1], [], []>} : vector<80x128xf32>, vector<128x128xf32>, vector<80x128xf32> -> vector<80x128xf32>
    %cst_14 = arith.constant dense<0.000000e+00> : vector<80x80xf32>
    %18 = tpu.matmul %17, %13, %cst_14 {dimension_numbers = #tpu.dot_dimension_numbers<[1], [1], [0], [0], [0, 0, 1, 0], [], []>} : vector<80x128xf32>, vector<80x128xf32>, vector<80x80xf32> -> vector<80x80xf32>
    %c0_15 = arith.constant 0 : index
    %c0_16 = arith.constant 0 : index
    %19 = vector.load %arg9[%c0_15, %c0_16] : memref<80x80xf32, #tpu.memory_space<vmem>>, vector<80x80xf32>
    %20 = arith.addf %18, %19 : vector<80x80xf32>
    %cst_17 = arith.constant dense<0xFF800000> : vector<80xf32>
    %21 = vector.multi_reduction <maximumf>, %20, %cst_17 [1] : vector<80x80xf32> to vector<80xf32>
    %22 = vector.shape_cast %21 : vector<80xf32> to vector<80x1xf32>
    %23 = vector.broadcast %22 : vector<80x1xf32> to vector<80x80xf32>
    %24 = arith.subf %20, %23 : vector<80x80xf32>
    %25 = math.exp %24 : vector<80x80xf32>
    %cst_18 = arith.constant dense<0.000000e+00> : vector<80xf32>
    %26 = vector.multi_reduction <add>, %25, %cst_18 [1] : vector<80x80xf32> to vector<80xf32>
    %27 = vector.shape_cast %26 : vector<80xf32> to vector<80x1xf32>
    %28 = vector.broadcast %27 : vector<80x1xf32> to vector<80x80xf32>
    %29 = arith.divf %25, %28 : vector<80x80xf32>
    %cst_19 = arith.constant dense<0.000000e+00> : vector<80x128xf32>
    %30 = tpu.matmul %15, %16, %cst_19 {dimension_numbers = #tpu.dot_dimension_numbers<[1], [0], [0], [1], [0, 0, 1, 1], [], []>} : vector<80x128xf32>, vector<128x128xf32>, vector<80x128xf32> -> vector<80x128xf32>
    %cst_20 = arith.constant dense<0.000000e+00> : vector<80x128xf32>
    %31 = tpu.matmul %29, %30, %cst_20 {dimension_numbers = #tpu.dot_dimension_numbers<[1], [0], [0], [1], [0, 0, 1, 1], [], []>} : vector<80x80xf32>, vector<80x128xf32>, vector<80x128xf32> -> vector<80x128xf32>
    %c0_21 = arith.constant 0 : index
    %c0_22 = arith.constant 0 : index
    %32 = vector.load %arg10[%c0_21, %c0_22] : memref<10x80xf32, #tpu.memory_space<vmem>>, vector<10x80xf32>
    %33 = arith.mulf %31, %9 : vector<80x128xf32>
    %cst_23 = arith.constant dense<0.000000e+00> : vector<10x128xf32>
    %34 = tpu.matmul %32, %33, %cst_23 {dimension_numbers = #tpu.dot_dimension_numbers<[1], [0], [0], [1], [0, 0, 1, 1], [], []>} : vector<10x80xf32>, vector<80x128xf32>, vector<10x128xf32> -> vector<10x128xf32>
    %c0_24 = arith.constant 0 : index
    %c0_25 = arith.constant 0 : index
    %35 = vector.load %arg4[%c0_24, %c0_25] : memref<128x128xf32, #tpu.memory_space<vmem>>, vector<128x128xf32>
    %cst_26 = arith.constant dense<0.000000e+00> : vector<10x128xf32>
    %36 = tpu.matmul %34, %35, %cst_26 {dimension_numbers = #tpu.dot_dimension_numbers<[1], [0], [0], [1], [0, 0, 1, 1], [], []>} : vector<10x128xf32>, vector<128x128xf32>, vector<10x128xf32> -> vector<10x128xf32>
    %c0_27 = arith.constant 0 : index
    %c0_28 = arith.constant 0 : index
    %37 = vector.load %arg5[%c0_27, %c0_28] : memref<1x128xf32, #tpu.memory_space<vmem>>, vector<1x128xf32>
    %38 = vector.broadcast %37 : vector<1x128xf32> to vector<10x128xf32>
    %39 = arith.addf %36, %38 : vector<10x128xf32>
    %c0_29 = arith.constant 0 : index
    %c0_30 = arith.constant 0 : index
    %c0_31 = arith.constant 0 : index
    %40 = vector.load %arg11[%c0_29, %c0_30, %c0_31] : memref<1x10x128xf32, #tpu.memory_space<vmem>>, vector<1x10x128xf32>
    %41 = vector.shape_cast %40 : vector<1x10x128xf32> to vector<10x128xf32>
    %42 = vector.shape_cast %39 : vector<10x128xf32> to vector<1x10x128xf32>
    tpu.vector_store %arg11[%c0_29, %c0_30, %c0_31], %42 {strides = array<i32>} : memref<1x10x128xf32, #tpu.memory_space<vmem>>, vector<1x10x128xf32>,
    return
  }
  func.func @transform_0(%arg0: i32) -> (i32, i32, i32) {
    %c0_i32 = arith.constant 0 : i32
    %c0_i32_0 = arith.constant 0 : i32
    %c0_i32_1 = arith.constant 0 : i32
    return %arg0, %c0_i32, %c0_i32_0 : i32, i32, i32
  }
  func.func @transform_1(%arg0: i32) -> (i32, i32) {
    %c0_i32 = arith.constant 0 : i32
    %c0_i32_0 = arith.constant 0 : i32
    %c0_i32_1 = arith.constant 0 : i32
    return %c0_i32, %c0_i32_0 : i32, i32
  }
  func.func @transform_2(%arg0: i32) -> (i32, i32) {
    %c0_i32 = arith.constant 0 : i32
    %c0_i32_0 = arith.constant 0 : i32
    %c0_i32_1 = arith.constant 0 : i32
    return %c0_i32, %c0_i32_0 : i32, i32
  }
  func.func @transform_3(%arg0: i32) -> (i32, i32) {
    %c0_i32 = arith.constant 0 : i32
    %c0_i32_0 = arith.constant 0 : i32
    %c0_i32_1 = arith.constant 0 : i32
    return %c0_i32, %c0_i32_0 : i32, i32
  }
  func.func @transform_4(%arg0: i32) -> (i32, i32) {
    %c0_i32 = arith.constant 0 : i32
    %c0_i32_0 = arith.constant 0 : i32
    %c0_i32_1 = arith.constant 0 : i32
    return %c0_i32, %c0_i32_0 : i32, i32
  }
  func.func @transform_5(%arg0: i32) -> (i32, i32) {
    %c0_i32 = arith.constant 0 : i32
    %c0_i32_0 = arith.constant 0 : i32
    %c0_i32_1 = arith.constant 0 : i32
    return %c0_i32, %c0_i32_0 : i32, i32
  }
  func.func @transform_6(%arg0: i32) -> (i32, i32) {
    %c0_i32 = arith.constant 0 : i32
    %c0_i32_0 = arith.constant 0 : i32
    %c0_i32_1 = arith.constant 0 : i32
    return %c0_i32, %c0_i32_0 : i32, i32
  }
  func.func @transform_7(%arg0: i32) -> (i32, i32) {
    %c0_i32 = arith.constant 0 : i32
    %c0_i32_0 = arith.constant 0 : i32
    %c0_i32_1 = arith.constant 0 : i32
    return %c0_i32, %c0_i32_0 : i32, i32
  }
  func.func @transform_8(%arg0: i32) -> (i32, i32) {
    %c0_i32 = arith.constant 0 : i32
    %c0_i32_0 = arith.constant 0 : i32
    %c0_i32_1 = arith.constant 0 : i32
    return %c0_i32, %c0_i32_0 : i32, i32
  }
  func.func @transform_9(%arg0: i32) -> (i32, i32) {
    %c0_i32 = arith.constant 0 : i32
    %c0_i32_0 = arith.constant 0 : i32
    %c0_i32_1 = arith.constant 0 : i32
    return %c0_i32, %c0_i32_0 : i32, i32
  }
  func.func @transform_10(%arg0: i32) -> (i32, i32, i32) {
    %c0_i32 = arith.constant 0 : i32
    %c0_i32_0 = arith.constant 0 : i32
    %c0_i32_1 = arith.constant 0 : i32
    return %arg0, %c0_i32, %c0_i32_0 : i32, i32, i32
  }
}

</mosaic_0001>

<llo_original>
// kernel: multi_head_self_attention.1
$region0: #{multi_head_self_attention.1}
  #allocation0 [shape = 'u32[]', space=smem, size = 0x4, offset = 0x4, fixed_abs, tag = 'smem constant byte address 0x4 - core index']
  #allocation1 [shape = 'u32[144,128]{1,0:T(1,128)}', space=vmem, size = 0x12000, scoped, tag = 'internal scratch']
  %s0 = inlined_call_operand.vmem [shape: f32[2,10,128], index: 0, kind: input, shape index: {}]
  %s1 = inlined_call_operand.vmem [shape: f32[128,384], index: 1, kind: input, shape index: {}]
  %s2 = inlined_call_operand.vmem [shape: f32[1,384], index: 2, kind: input, shape index: {}]
  %s3 = inlined_call_operand.vmem [shape: f32[128,128], index: 3, kind: input, shape index: {}]
  %s4 = inlined_call_operand.vmem [shape: f32[1,128], index: 4, kind: input, shape index: {}]
  %s5 = inlined_call_operand.vmem [shape: f32[80,10], index: 5, kind: input, shape index: {}]
  %s6 = inlined_call_operand.vmem [shape: f32[80,128], index: 6, kind: input, shape index: {}]
  %s7 = inlined_call_operand.vmem [shape: f32[128,128], index: 7, kind: input, shape index: {}]
  %s8 = inlined_call_operand.vmem [shape: f32[80,80], index: 8, kind: input, shape index: {}]
  %s9 = inlined_call_operand.vmem [shape: f32[10,80], index: 9, kind: input, shape index: {}]
  %s10 = inlined_call_operand.vmem [shape: f32[2,10,128], index: 10, kind: output, shape index: {}]
  %s11 = sld [smem:[#allocation0]]
  $region73: #{multi_head_self_attention.1} parent=0
    _
  %s13 = ssub.s32 1, %s11
  %s14 = scalar_select 0, %s13, %s11
  loop: start=0, step=1, limit=4
  $region2: #{multi_head_self_attention.1} parent=0 // loop_pre_header
    _
  $region3: #{multi_head_self_attention.1} parent=0 // loop_header
    %s16 = sphi 0, %s20
    %p17 = scmp.ge.s32.totalorder %s16, 4
    %s26 = sphi 0, %s28
    %s29 = sphi 0, %s26
    %s30 = sphi 0, %s29
    %s46 = sphi 0, %s30
    %s50 = sphi 0, %s50
    %s52 = sphi 0, %s50
    %s53 = sphi 0, %s52
    %s67 = sphi 0, %s53
    %s71 = sphi 0, %s71
    %s73 = sphi 0, %s71
    %s74 = sphi 0, %s73
    %s88 = sphi 0, %s74
    %s92 = sphi 0, %s92
    %s94 = sphi 0, %s92
    %s95 = sphi 0, %s94
    %s109 = sphi 0, %s95
    %s113 = sphi 0, %s113
    %s115 = sphi 0, %s113
    %s116 = sphi 0, %s115
    %s130 = sphi 0, %s116
    %s134 = sphi 0, %s134
    %s136 = sphi 0, %s134
    %s137 = sphi 0, %s136
    %s151 = sphi 0, %s137
    %s155 = sphi 0, %s155
    %s157 = sphi 0, %s155
    %s158 = sphi 0, %s157
    %s172 = sphi 0, %s158
    %s176 = sphi 0, %s176
    %s178 = sphi 0, %s176
    %s179 = sphi 0, %s178
    %s193 = sphi 0, %s179
    %s197 = sphi 0, %s197
    %s199 = sphi 0, %s197
    %s200 = sphi 0, %s199
    %s214 = sphi 0, %s200
    %s218 = sphi 0, %s218
    %s220 = sphi 0, %s218
    %s221 = sphi 0, %s220
    %s235 = sphi 0, %s221
    %s241 = sphi 0, %s243
    %s244 = sphi 0, %s241
    %s245 = sphi 0, %s244
    %s261 = sphi 0, %s245
  $region4: #{multi_head_self_attention.1} parent=0 // loop_header_branch
    %19 = sbr.rel (%p17) target = $region8
  $region5: #{multi_head_self_attention.1} parent=0 // loop_body
    %s21 = ssub.s32 %s16, 1
    %s22 = ssub.s32 %s16, 2
    %s23 = sadd.s32 %s16, 1
    %s24 = ssub.s32 %s16, %s23
    %p25 = scmp.eq.s32.totalorder %s24, 0
    %s27 = sadd.s32 %s26, 1
    %s28 = scalar_select %p25, %s26, %s27
    %p31 = pneg %p25
    %p32 = scmp.eq.s32.totalorder %s16, 1
    %p33 = por %p31, %p32
    %p34 = scmp.ne.s32.totalorder %s26, %s29
    %p35 = scmp.eq.s32.totalorder %s16, 0
    %p36 = por %p34, %p35
    %p37 = scmp.ne.s32.totalorder %s26, %s29
    %p38 = scmp.eq.s32.totalorder %s21, 1
    %p39 = por %p37, %p38
    %p40 = scmp.ne.s32.totalorder %s29, %s30
    %p41 = scmp.eq.s32.totalorder %s21, 0
    %p42 = por %p40, %p41
    %p43 = scmp.ne.s32.totalorder %s29, %s30
    %p44 = scmp.eq.s32.totalorder %s22, 1
    %p45 = por %p43, %p44
    %p47 = scmp.ne.s32.totalorder %s30, %s46
    %p48 = scmp.eq.s32.totalorder %s22, 0
    %p49 = por %p47, %p48
    %s51 = sadd.s32 %s50, 1
    %p54 = scmp.eq.s32.totalorder %s16, 1
    %p55 = scmp.ne.s32.totalorder %s50, %s52
    %p56 = scmp.eq.s32.totalorder %s16, 0
    %p57 = por %p55, %p56
    %p58 = scmp.ne.s32.totalorder %s50, %s52
    %p59 = scmp.eq.s32.totalorder %s21, 1
    %p60 = por %p58, %p59
    %p61 = scmp.ne.s32.totalorder %s52, %s53
    %p62 = scmp.eq.s32.totalorder %s21, 0
    %p63 = por %p61, %p62
    %p64 = scmp.ne.s32.totalorder %s52, %s53
    %p65 = scmp.eq.s32.totalorder %s22, 1
    %p66 = por %p64, %p65
    %p68 = scmp.ne.s32.totalorder %s53, %s67
    %p69 = scmp.eq.s32.totalorder %s22, 0
    %p70 = por %p68, %p69
    %s72 = sadd.s32 %s71, 1
    %p75 = scmp.eq.s32.totalorder %s16, 1
    %p76 = scmp.ne.s32.totalorder %s71, %s73
    %p77 = scmp.eq.s32.totalorder %s16, 0
    %p78 = por %p76, %p77
    %p79 = scmp.ne.s32.totalorder %s71, %s73
    %p80 = scmp.eq.s32.totalorder %s21, 1
    %p81 = por %p79, %p80
    %p82 = scmp.ne.s32.totalorder %s73, %s74
    %p83 = scmp.eq.s32.totalorder %s21, 0
    %p84 = por %p82, %p83
    %p85 = scmp.ne.s32.totalorder %s73, %s74
    %p86 = scmp.eq.s32.totalorder %s22, 1
    %p87 = por %p85, %p86
    %p89 = scmp.ne.s32.totalorder %s74, %s88
    %p90 = scmp.eq.s32.totalorder %s22, 0
    %p91 = por %p89, %p90
    %s93 = sadd.s32 %s92, 1
    %p96 = scmp.eq.s32.totalorder %s16, 1
    %p97 = scmp.ne.s32.totalorder %s92, %s94
    %p98 = scmp.eq.s32.totalorder %s16, 0
    %p99 = por %p97, %p98
    %p100 = scmp.ne.s32.totalorder %s92, %s94
    %p101 = scmp.eq.s32.totalorder %s21, 1
    %p102 = por %p100, %p101
    %p103 = scmp.ne.s32.totalorder %s94, %s95
    %p104 = scmp.eq.s32.totalorder %s21, 0
    %p105 = por %p103, %p104
    %p106 = scmp.ne.s32.totalorder %s94, %s95
    %p107 = scmp.eq.s32.totalorder %s22, 1
    %p108 = por %p106, %p107
    %p110 = scmp.ne.s32.totalorder %s95, %s109
    %p111 = scmp.eq.s32.totalorder %s22, 0
    %p112 = por %p110, %p111
    %s114 = sadd.s32 %s113, 1
    %p117 = scmp.eq.s32.totalorder %s16, 1
    %p118 = scmp.ne.s32.totalorder %s113, %s115
    %p119 = scmp.eq.s32.totalorder %s16, 0
    %p120 = por %p118, %p119
    %p121 = scmp.ne.s32.totalorder %s113, %s115
    %p122 = scmp.eq.s32.totalorder %s21, 1
    %p123 = por %p121, %p122
    %p124 = scmp.ne.s32.totalorder %s115, %s116
    %p125 = scmp.eq.s32.totalorder %s21, 0
    %p126 = por %p124, %p125
    %p127 = scmp.ne.s32.totalorder %s115, %s116
    %p128 = scmp.eq.s32.totalorder %s22, 1
    %p129 = por %p127, %p128
    %p131 = scmp.ne.s32.totalorder %s116, %s130
    %p132 = scmp.eq.s32.totalorder %s22, 0
    %p133 = por %p131, %p132
    %s135 = sadd.s32 %s134, 1
    %p138 = scmp.eq.s32.totalorder %s16, 1
    %p139 = scmp.ne.s32.totalorder %s134, %s136
    %p140 = scmp.eq.s32.totalorder %s16, 0
    %p141 = por %p139, %p140
    %p142 = scmp.ne.s32.totalorder %s134, %s136
    %p143 = scmp.eq.s32.totalorder %s21, 1
    %p144 = por %p142, %p143
    %p145 = scmp.ne.s32.totalorder %s136, %s137
    %p146 = scmp.eq.s32.totalorder %s21, 0
    %p147 = por %p145, %p146
    %p148 = scmp.ne.s32.totalorder %s136, %s137
    %p149 = scmp.eq.s32.totalorder %s22, 1
    %p150 = por %p148, %p149
    %p152 = scmp.ne.s32.totalorder %s137, %s151
    %p153 = scmp.eq.s32.totalorder %s22, 0
    %p154 = por %p152, %p153
    %s156 = sadd.s32 %s155, 1
    %p159 = scmp.eq.s32.totalorder %s16, 1
    %p160 = scmp.ne.s32.totalorder %s155, %s157
    %p161 = scmp.eq.s32.totalorder %s16, 0
    %p162 = por %p160, %p161
    %p163 = scmp.ne.s32.totalorder %s155, %s157
    %p164 = scmp.eq.s32.totalorder %s21, 1
    %p165 = por %p163, %p164
    %p166 = scmp.ne.s32.totalorder %s157, %s158
    %p167 = scmp.eq.s32.totalorder %s21, 0
    %p168 = por %p166, %p167
    %p169 = scmp.ne.s32.totalorder %s157, %s158
    %p170 = scmp.eq.s32.totalorder %s22, 1
    %p171 = por %p169, %p170
    %p173 = scmp.ne.s32.totalorder %s158, %s172
    %p174 = scmp.eq.s32.totalorder %s22, 0
    %p175 = por %p173, %p174
    %s177 = sadd.s32 %s176, 1
    %p180 = scmp.eq.s32.totalorder %s16, 1
    %p181 = scmp.ne.s32.totalorder %s176, %s178
    %p182 = scmp.eq.s32.totalorder %s16, 0
    %p183 = por %p181, %p182
    %p184 = scmp.ne.s32.totalorder %s176, %s178
    %p185 = scmp.eq.s32.totalorder %s21, 1
    %p186 = por %p184, %p185
    %p187 = scmp.ne.s32.totalorder %s178, %s179
    %p188 = scmp.eq.s32.totalorder %s21, 0
    %p189 = por %p187, %p188
    %p190 = scmp.ne.s32.totalorder %s178, %s179
    %p191 = scmp.eq.s32.totalorder %s22, 1
    %p192 = por %p190, %p191
    %p194 = scmp.ne.s32.totalorder %s179, %s193
    %p195 = scmp.eq.s32.totalorder %s22, 0
    %p196 = por %p194, %p195
    %s198 = sadd.s32 %s197, 1
    %p201 = scmp.eq.s32.totalorder %s16, 1
    %p202 = scmp.ne.s32.totalorder %s197, %s199
    %p203 = scmp.eq.s32.totalorder %s16, 0
    %p204 = por %p202, %p203
    %p205 = scmp.ne.s32.totalorder %s197, %s199
    %p206 = scmp.eq.s32.totalorder %s21, 1
    %p207 = por %p205, %p206
    %p208 = scmp.ne.s32.totalorder %s199, %s200
    %p209 = scmp.eq.s32.totalorder %s21, 0
    %p210 = por %p208, %p209
    %p211 = scmp.ne.s32.totalorder %s199, %s200
    %p212 = scmp.eq.s32.totalorder %s22, 1
    %p213 = por %p211, %p212
    %p215 = scmp.ne.s32.totalorder %s200, %s214
    %p216 = scmp.eq.s32.totalorder %s22, 0
    %p217 = por %p215, %p216
    %s219 = sadd.s32 %s218, 1
    %p222 = scmp.eq.s32.totalorder %s16, 1
    %p223 = scmp.ne.s32.totalorder %s218, %s220
    %p224 = scmp.eq.s32.totalorder %s16, 0
    %p225 = por %p223, %p224
    %p226 = scmp.ne.s32.totalorder %s218, %s220
    %p227 = scmp.eq.s32.totalorder %s21, 1
    %p228 = por %p226, %p227
    %p229 = scmp.ne.s32.totalorder %s220, %s221
    %p230 = scmp.eq.s32.totalorder %s21, 0
    %p231 = por %p229, %p230
    %p232 = scmp.ne.s32.totalorder %s220, %s221
    %p233 = scmp.eq.s32.totalorder %s22, 1
    %p234 = por %p232, %p233
    %p236 = scmp.ne.s32.totalorder %s221, %s235
    %p237 = scmp.eq.s32.totalorder %s22, 0
    %p238 = por %p236, %p237
    %s239 = ssub.s32 %s16, %s23
    %p240 = scmp.eq.s32.totalorder %s239, 0
    %s242 = sadd.s32 %s241, 1
    %s243 = scalar_select %p240, %s241, %s242
    %p246 = pneg %p240
    %p247 = scmp.eq.s32.totalorder %s16, 1
    %p248 = por %p246, %p247
    %p249 = scmp.ne.s32.totalorder %s241, %s244
    %p250 = scmp.eq.s32.totalorder %s16, 0
    %p251 = por %p249, %p250
    %p252 = scmp.ne.s32.totalorder %s241, %s244
    %p253 = scmp.eq.s32.totalorder %s21, 1
    %p254 = por %p252, %p253
    %p255 = scmp.ne.s32.totalorder %s244, %s245
    %p256 = scmp.eq.s32.totalorder %s21, 0
    %p257 = por %p255, %p256
    %p258 = scmp.ne.s32.totalorder %s244, %s245
    %p259 = scmp.eq.s32.totalorder %s22, 1
    %p260 = por %p258, %p259
    %p262 = scmp.ne.s32.totalorder %s245, %s261
    %p263 = scmp.eq.s32.totalorder %s22, 0
    %p264 = por %p262, %p263
    %p265 = scmp.le.s32.totalorder 1, %s16
    %p266 = scmp.lt.s32.totalorder %s16, 3
    %p267 = pnand %p265, %p266
    %p268 = pneg %p267
    // Predicated region
    $region9: #{multi_head_self_attention.1} parent=5 // pred_check
      _
    $region10: #{multi_head_self_attention.1} parent=5 // pred_check_branch
      %270 = sbr.rel (%p267) target = $region12
    $region11: #{multi_head_self_attention.1} parent=5 // pred_region
      %s271 = ssub.s32 %s16, 1
      // Predicated region
      $region13: #{multi_head_self_attention.1} parent=11 // pred_check
        %p272 = pneg %p63
      $region14: #{multi_head_self_attention.1} parent=11 // pred_check_branch
        %274 = sbr.rel (%p272) target = $region16
      $region15: #{multi_head_self_attention.1} parent=11 // pred_region
        _
      $region16: #{multi_head_self_attention.1} parent=11 // pred_fallthru
        _
      // Predicated region
      $region17: #{multi_head_self_attention.1} parent=11 // pred_check
        %p275 = pneg %p84
      $region18: #{multi_head_self_attention.1} parent=11 // pred_check_branch
        %277 = sbr.rel (%p275) target = $region20
      $region19: #{multi_head_self_attention.1} parent=11 // pred_region
        _
      $region20: #{multi_head_self_attention.1} parent=11 // pred_fallthru
        _
      // Predicated region
      $region21: #{multi_head_self_attention.1} parent=11 // pred_check
        %p278 = pneg %p105
      $region22: #{multi_head_self_attention.1} parent=11 // pred_check_branch
        %280 = sbr.rel (%p278) target = $region24
      $region23: #{multi_head_self_attention.1} parent=11 // pred_region
        _
      $region24: #{multi_head_self_attention.1} parent=11 // pred_fallthru
        _
      // Predicated region
      $region25: #{multi_head_self_attention.1} parent=11 // pred_check
        %p281 = pneg %p126
      $region26: #{multi_head_self_attention.1} parent=11 // pred_check_branch
        %283 = sbr.rel (%p281) target = $region28
      $region27: #{multi_head_self_attention.1} parent=11 // pred_region
        _
      $region28: #{multi_head_self_attention.1} parent=11 // pred_fallthru
        _
      // Predicated region
      $region29: #{multi_head_self_attention.1} parent=11 // pred_check
        %p284 = pneg %p147
      $region30: #{multi_head_self_attention.1} parent=11 // pred_check_branch
        %286 = sbr.rel (%p284) target = $region32
      $region31: #{multi_head_self_attention.1} parent=11 // pred_region
        _
      $region32: #{multi_head_self_attention.1} parent=11 // pred_fallthru
        _
      // Predicated region
      $region33: #{multi_head_self_attention.1} parent=11 // pred_check
        %p287 = pneg %p168
      $region34: #{multi_head_self_attention.1} parent=11 // pred_check_branch
        %289 = sbr.rel (%p287) target = $region36
      $region35: #{multi_head_self_attention.1} parent=11 // pred_region
        _
      $region36: #{multi_head_self_attention.1} parent=11 // pred_fallthru
        _
      // Predicated region
      $region37: #{multi_head_self_attention.1} parent=11 // pred_check
        %p290 = pneg %p189
      $region38: #{multi_head_self_attention.1} parent=11 // pred_check_branch
        %292 = sbr.rel (%p290) target = $region40
      $region39: #{multi_head_self_attention.1} parent=11 // pred_region
        _
      $region40: #{multi_head_self_attention.1} parent=11 // pred_fallthru
        _
      // Predicated region
      $region41: #{multi_head_self_attention.1} parent=11 // pred_check
        %p293 = pneg %p210
      $region42: #{multi_head_self_attention.1} parent=11 // pred_check_branch
        %295 = sbr.rel (%p293) target = $region44
      $region43: #{multi_head_self_attention.1} parent=11 // pred_region
        _
      $region44: #{multi_head_self_attention.1} parent=11 // pred_fallthru
        _
      // Predicated region
      $region45: #{multi_head_self_attention.1} parent=11 // pred_check
        %p296 = pneg %p231
      $region46: #{multi_head_self_attention.1} parent=11 // pred_check_branch
        %298 = sbr.rel (%p296) target = $region48
      $region47: #{multi_head_self_attention.1} parent=11 // pred_region
        _
      $region48: #{multi_head_self_attention.1} parent=11 // pred_fallthru
        _
    $region12: #{multi_head_self_attention.1} parent=5 // pred_fallthru
      _
    %p299 = scmp.lt.s32.totalorder %s16, 2
    // Predicated region
    $region49: #{multi_head_self_attention.1} parent=5 // pred_check
      %p300 = pneg %p299
    $region50: #{multi_head_self_attention.1} parent=5 // pred_check_branch
      %302 = sbr.rel (%p300) target = $region52
    $region51: #{multi_head_self_attention.1} parent=5 // pred_region
      // Predicated region
      $region53: #{multi_head_self_attention.1} parent=51 // pred_check
        %p303 = pneg %p36
      $region54: #{multi_head_self_attention.1} parent=51 // pred_check_branch
        %305 = sbr.rel (%p303) target = $region56
      $region55: #{multi_head_self_attention.1} parent=51 // pred_region
        %p306 = scmp.lt.s32.totalorder %s16, 1
        %s307 = scalar_select %p306, %s16, 1
        %s308 = smul.addr %s307, 2
        %s309 = smul.addr %s308, 8
        %s310 = scalar_lea.vmem %s0, %s309
      $region56: #{multi_head_self_attention.1} parent=51 // pred_fallthru
        _
    $region52: #{multi_head_self_attention.1} parent=5 // pred_fallthru
      _
    %p311 = scmp.le.s32.totalorder 1, %s16
    %p312 = scmp.lt.s32.totalorder %s16, 3
    %p313 = pnand %p311, %p312
    %p314 = pneg %p313
    // Predicated region
    $region57: #{multi_head_self_attention.1} parent=5 // pred_check
      _
    $region58: #{multi_head_self_attention.1} parent=5 // pred_check_branch
      %316 = sbr.rel (%p313) target = $region60
    $region59: #{multi_head_self_attention.1} parent=5 // pred_region
      %s317 = ssub.s32 %s16, 1
      %p318 = scmp.lt.s32.totalorder %s21, 1
      %s319 = scalar_select %p318, %s21, 1
      %s320 = smul.addr %s319, 2
      %s321 = smul.addr %s320, 8
      %s322 = scalar_lea.vmem %s0, %s321
      %p323 = pneg %p42
      %p324 = pneg %p39
      %p325 = pneg %p63
      %p326 = pneg %p60
      %p327 = pneg %p84
      %p328 = pneg %p81
      %p329 = pneg %p105
      %p330 = pneg %p102
      %p331 = pneg %p126
      %p332 = pneg %p123
      %p333 = pneg %p147
      %p334 = pneg %p144
      %p335 = pneg %p168
      %p336 = pneg %p165
      %p337 = pneg %p189
      %p338 = pneg %p186
      %p339 = pneg %p210
      %p340 = pneg %p207
      %p341 = pneg %p231
      %p342 = pneg %p228
      %p343 = pneg %p257
      %p344 = pneg %p254
      %p345 = scmp.lt.s32.totalorder %s21, 1
      %s346 = scalar_select %p345, %s21, 1
      %s347 = smul.addr %s346, 2
      %s348 = smul.addr %s347, 8
      %s349 = scalar_lea.vmem %s10, %s348
      %p350 = scmp.lt.s32.totalorder %s21, 1
      %s351 = scalar_select %p350, %s21, 1
      %s352 = smul.addr %s351, 2
      %s353 = smul.addr %s352, 8
      %s354 = scalar_lea.vmem %s0, %s353
      %p355 = scmp.lt.s32.totalorder %s21, 1
      %s356 = scalar_select %p355, %s21, 1
      %s357 = smul.addr %s356, 2
      %s358 = smul.addr %s357, 8
      %s359 = scalar_lea.vmem %s10, %s358
      %v360 = vld [vmem:[%s354] sm:$0xff]
      %v361 = vld [vmem:[%s354 + $0x8] sm:$0x3]
      %v362 = vld [vmem:[%s1] sm:$0xff]
      %v363 = vld [vmem:[%s1 + $0x8] sm:$0xff]
      %v364 = vld [vmem:[%s1 + $0x10] sm:$0xff]
      %v365 = vld [vmem:[%s1 + $0x18] sm:$0xff]
      %v366 = vld [vmem:[%s1 + $0x20] sm:$0xff]
      %v367 = vld [vmem:[%s1 + $0x28] sm:$0xff]
      %v368 = vld [vmem:[%s1 + $0x30] sm:$0xff]
      %v369 = vld [vmem:[%s1 + $0x38] sm:$0xff]
      %v370 = vld [vmem:[%s1 + $0x40] sm:$0xff]
      %v371 = vld [vmem:[%s1 + $0x48] sm:$0xff]
      %v372 = vld [vmem:[%s1 + $0x50] sm:$0xff]
      %v373 = vld [vmem:[%s1 + $0x58] sm:$0xff]
      %v374 = vld [vmem:[%s1 + $0x60] sm:$0xff]
      %v375 = vld [vmem:[%s1 + $0x68] sm:$0xff]
      %v376 = vld [vmem:[%s1 + $0x70] sm:$0xff]
      %v377 = vld [vmem:[%s1 + $0x78] sm:$0xff]
      %v378 = vld [vmem:[%s1 + $0x80] sm:$0xff]
      %v379 = vld [vmem:[%s1 + $0x88] sm:$0xff]
      %v380 = vld [vmem:[%s1 + $0x90] sm:$0xff]
      %v381 = vld [vmem:[%s1 + $0x98] sm:$0xff]
      %v382 = vld [vmem:[%s1 + $0xa0] sm:$0xff]
      %v383 = vld [vmem:[%s1 + $0xa8] sm:$0xff]
      %v384 = vld [vmem:[%s1 + $0xb0] sm:$0xff]
      %v385 = vld [vmem:[%s1 + $0xb8] sm:$0xff]
      %v386 = vld [vmem:[%s1 + $0xc0] sm:$0xff]
      %v387 = vld [vmem:[%s1 + $0xc8] sm:$0xff]
      %v388 = vld [vmem:[%s1 + $0xd0] sm:$0xff]
      %v389 = vld [vmem:[%s1 + $0xd8] sm:$0xff]
      %v390 = vld [vmem:[%s1 + $0xe0] sm:$0xff]
      %v391 = vld [vmem:[%s1 + $0xe8] sm:$0xff]
      %v392 = vld [vmem:[%s1 + $0xf0] sm:$0xff]
      %v393 = vld [vmem:[%s1 + $0xf8] sm:$0xff]
      %v394 = vld [vmem:[%s1 + $0x100] sm:$0xff]
      %v395 = vld [vmem:[%s1 + $0x108] sm:$0xff]
      %v396 = vld [vmem:[%s1 + $0x110] sm:$0xff]
      %v397 = vld [vmem:[%s1 + $0x118] sm:$0xff]
      %v398 = vld [vmem:[%s1 + $0x120] sm:$0xff]
      %v399 = vld [vmem:[%s1 + $0x128] sm:$0xff]
      %v400 = vld [vmem:[%s1 + $0x130] sm:$0xff]
      %v401 = vld [vmem:[%s1 + $0x138] sm:$0xff]
      %v402 = vld [vmem:[%s1 + $0x140] sm:$0xff]
      %v403 = vld [vmem:[%s1 + $0x148] sm:$0xff]
      %v404 = vld [vmem:[%s1 + $0x150] sm:$0xff]
      %v405 = vld [vmem:[%s1 + $0x158] sm:$0xff]
      %v406 = vld [vmem:[%s1 + $0x160] sm:$0xff]
      %v407 = vld [vmem:[%s1 + $0x168] sm:$0xff]
      %v408 = vld [vmem:[%s1 + $0x170] sm:$0xff]
      %v409 = vld [vmem:[%s1 + $0x178] sm:$0xff]
      %v410 = vld [vmem:[%s2] sm:$0x7]
      %v412 = vlaneseq
      %v413 = vshrl.u32 %v412, 7
      %v414 = vsub.s32 0, %v413
      %v415 = vrot.slane %v410, %v414
      %v416 = vlaneseq
      %v417 = vshrl.u32 %v416, 7
      %v418 = vsub.s32 1, %v417
      %v419 = vrot.slane %v410, %v418
      %v420 = vlaneseq
      %v421 = vshrl.u32 %v420, 7
      %v422 = vsub.s32 2, %v421
      %v423 = vrot.slane %v410, %v422
      %427 = vmatprep.subr.mxu0 %v408
      %428 = vmatpush1.msra.mxu0 %v407
      %429 = vmatprep.subr.mxu0 %v405
      %430 = vmatpush1.msra.mxu0 %v404
      %431 = vmatprep.subr.mxu0 %v402
      %432 = vmatpush1.msra.mxu0 %v401
      %433 = vmatprep.subr.mxu0 %v399
      %434 = vmatpush1.msra.mxu0 %v398
      %435 = vmatprep.subr.mxu0 %v396
      %436 = vmatpush1.msra.mxu0 %v395
      %437 = vmatprep.subr.mxu0 %v393
      %438 = vmatpush1.msra.mxu0 %v392
      %439 = vmatprep.subr.mxu0 %v390
      %440 = vmatpush1.msra.mxu0 %v389
      %441 = vmatprep.subr.mxu0 %v387
      %442 = vmatpush1.msra.mxu0 %v386
      %443 = vmatprep.subr.mxu0 %v384
      %444 = vmatpush1.msra.mxu0 %v383
      %445 = vmatprep.subr.mxu0 %v381
      %446 = vmatpush1.msra.mxu0 %v380
      %447 = vmatprep.subr.mxu0 %v378
      %448 = vmatpush1.msra.mxu0 %v377
      %449 = vmatprep.subr.mxu0 %v375
      %450 = vmatpush1.msra.mxu0 %v374
      %451 = vmatprep.subr.mxu0 %v372
      %452 = vmatpush1.msra.mxu0 %v371
      %453 = vmatprep.subr.mxu0 %v369
      %454 = vmatpush1.msra.mxu0 %v368
      %455 = vmatprep.subr.mxu0 %v366
      %456 = vmatpush1.msra.mxu0 %v365
      %457 = vmatprep.subr.mxu0 %v363
      %458 = vmatpush1.msra.mxu0 %v362
      %459 = vmatprep.subr.mxu0 0.0
      %460 = vmatpush2.msra.mxu0 0.0
      %461 = vmatprep.subr.mxu0 0.0
      %462 = vmatpush2.msra.mxu0 0.0
      %463 = vmatprep.subr.mxu0 0.0
      %464 = vmatpush2.msra.mxu0 0.0
      %465 = vmatprep.subr.mxu0 0.0
      %466 = vmatpush2.msra.mxu0 0.0
      %467 = vmatprep.subr.mxu0 0.0
      %468 = vmatpush2.msra.mxu0 0.0
      %469 = vmatprep.subr.mxu0 0.0
      %470 = vmatpush2.msra.mxu0 0.0
      %471 = vmatprep.subr.mxu0 0.0
      %472 = vmatpush2.msra.mxu0 0.0
      %473 = vmatprep.subr.mxu0 0.0
      %474 = vmatpush2.msra.mxu0 0.0
      %475 = vmatprep.subr.mxu0 0.0
      %476 = vmatpush2.msra.mxu0 0.0
      %477 = vmatprep.subr.mxu0 0.0
      %478 = vmatpush2.msra.mxu0 0.0
      %479 = vmatprep.subr.mxu0 0.0
      %480 = vmatpush2.msra.mxu0 0.0
      %481 = vmatprep.subr.mxu0 0.0
      %482 = vmatpush2.msra.mxu0 0.0
      %483 = vmatprep.subr.mxu0 0.0
      %484 = vmatpush2.msra.mxu0 0.0
      %485 = vmatprep.subr.mxu0 0.0
      %486 = vmatpush2.msra.mxu0 0.0
      %487 = vmatprep.subr.mxu0 0.0
      %488 = vmatpush2.msra.mxu0 0.0
      %489 = vmatprep.subr.mxu0 0.0
      %490 = vmatpush2.msra.mxu0 0.0
      %491 = vmatprep.mubr.f32.mxu0 0.0
      %492 = vmatmul.mubr.f32.gmra.mxu0 %v360
      %v493 = vpop.f32.mrf.mxu0
      %v494 = vadd.f32 %v415, %v493
      %v495 = vpop.f32.mrf.mxu0
      %v496 = vadd.f32 %v419, %v495
      %497 = vmatprep.mubr.f32.mxu0 0.0
      %498 = vmatmul.mubr.f32.gmra.mxu0 %v361
      %v499 = vpop.f32.mrf.mxu0
      %v500 = vadd.f32 %v415, %v499
      %v501 = vpop.f32.mrf.mxu0
      %v502 = vadd.f32 %v419, %v501
      %503 = vdwg.mxu0
      %504 = vmatprep.subr.mxu0 0.0
      %505 = vmatpush1.msra.mxu0 %v409
      %506 = vmatprep.subr.mxu0 0.0
      %507 = vmatpush1.msra.mxu0 %v406
      %508 = vmatprep.subr.mxu0 0.0
      %509 = vmatpush1.msra.mxu0 %v403
      %510 = vmatprep.subr.mxu0 0.0
      %511 = vmatpush1.msra.mxu0 %v400
      %512 = vmatprep.subr.mxu0 0.0
      %513 = vmatpush1.msra.mxu0 %v397
      %514 = vmatprep.subr.mxu0 0.0
      %515 = vmatpush1.msra.mxu0 %v394
      %516 = vmatprep.subr.mxu0 0.0
      %517 = vmatpush1.msra.mxu0 %v391
      %518 = vmatprep.subr.mxu0 0.0
      %519 = vmatpush1.msra.mxu0 %v388
      %520 = vmatprep.subr.mxu0 0.0
      %521 = vmatpush1.msra.mxu0 %v385
      %522 = vmatprep.subr.mxu0 0.0
      %523 = vmatpush1.msra.mxu0 %v382
      %524 = vmatprep.subr.mxu0 0.0
      %525 = vmatpush1.msra.mxu0 %v379
      %526 = vmatprep.subr.mxu0 0.0
      %527 = vmatpush1.msra.mxu0 %v376
      %528 = vmatprep.subr.mxu0 0.0
      %529 = vmatpush1.msra.mxu0 %v373
      %530 = vmatprep.subr.mxu0 0.0
      %531 = vmatpush1.msra.mxu0 %v370
      %532 = vmatprep.subr.mxu0 0.0
      %533 = vmatpush1.msra.mxu0 %v367
      %534 = vmatprep.subr.mxu0 0.0
      %535 = vmatpush1.msra.mxu0 %v364
      %536 = vmatprep.subr.mxu0 0.0
      %537 = vmatpush2.msra.mxu0 0.0
      %538 = vmatprep.subr.mxu0 0.0
      %539 = vmatpush2.msra.mxu0 0.0
      %540 = vmatprep.subr.mxu0 0.0
      %541 = vmatpush2.msra.mxu0 0.0
      %542 = vmatprep.subr.mxu0 0.0
      %543 = vmatpush2.msra.mxu0 0.0
      %544 = vmatprep.subr.mxu0 0.0
      %545 = vmatpush2.msra.mxu0 0.0
      %546 = vmatprep.subr.mxu0 0.0
      %547 = vmatpush2.msra.mxu0 0.0
      %548 = vmatprep.subr.mxu0 0.0
      %549 = vmatpush2.msra.mxu0 0.0
      %550 = vmatprep.subr.mxu0 0.0
      %551 = vmatpush2.msra.mxu0 0.0
      %552 = vmatprep.subr.mxu0 0.0
      %553 = vmatpush2.msra.mxu0 0.0
      %554 = vmatprep.subr.mxu0 0.0
      %555 = vmatpush2.msra.mxu0 0.0
      %556 = vmatprep.subr.mxu0 0.0
      %557 = vmatpush2.msra.mxu0 0.0
      %558 = vmatprep.subr.mxu0 0.0
      %559 = vmatpush2.msra.mxu0 0.0
      %560 = vmatprep.subr.mxu0 0.0
      %561 = vmatpush2.msra.mxu0 0.0
      %562 = vmatprep.subr.mxu0 0.0
      %563 = vmatpush2.msra.mxu0 0.0
      %564 = vmatprep.subr.mxu0 0.0
      %565 = vmatpush2.msra.mxu0 0.0
      %566 = vmatprep.subr.mxu0 0.0
      %567 = vmatpush2.msra.mxu0 0.0
      %568 = vmatprep.mubr.f32.mxu0 0.0
      %569 = vmatmul.mubr.f32.gmra.mxu0 %v360
      %v570 = vpop.f32.mrf.mxu0
      %v571 = vadd.f32 %v423, %v570
      %v572 = vpop.f32.mrf.mxu0
      %573 = vmatprep.mubr.f32.mxu0 0.0
      %574 = vmatmul.mubr.f32.gmra.mxu0 %v361
      %v575 = vpop.f32.mrf.mxu0
      %v576 = vadd.f32 %v423, %v575
      %v577 = vpop.f32.mrf.mxu0
      %578 = vdwg.mxu0
      %v579 = vld [vmem:[%s5] sm:$0xff]
      %v580 = vld [vmem:[%s5 + $0x8] sm:$0xff]
      %v581 = vld [vmem:[%s5 + $0x10] sm:$0xff]
      %v582 = vld [vmem:[%s5 + $0x18] sm:$0xff]
      %v583 = vld [vmem:[%s5 + $0x20] sm:$0xff]
      %v584 = vld [vmem:[%s5 + $0x28] sm:$0xff]
      %v585 = vld [vmem:[%s5 + $0x30] sm:$0xff]
      %v586 = vld [vmem:[%s5 + $0x38] sm:$0xff]
      %v587 = vld [vmem:[%s5 + $0x40] sm:$0xff]
      %v588 = vld [vmem:[%s5 + $0x48] sm:$0xff]
      %vm589 = vcmask 80896
      %v591 = vsel %vm589, %v579, 0
      %v594 = vsel %vm589, %v580, 0
      %v597 = vsel %vm589, %v581, 0
      %v600 = vsel %vm589, %v582, 0
      %v603 = vsel %vm589, %v583, 0
      %v606 = vsel %vm589, %v584, 0
      %v609 = vsel %vm589, %v585, 0
      %v612 = vsel %vm589, %v586, 0
      %v615 = vsel %vm589, %v587, 0
      %v618 = vsel %vm589, %v588, 0
      %vm620 = vcmask 1041408
      %v622 = vsel %vm620, %v500, 0
      %v625 = vsel %vm620, %v502, 0
      %v628 = vsel %vm620, %v576, 0
      %630 = vmatprep.subr.mxu0 0.0
      %631 = vmatpush1.msra.mxu0 0.0
      %632 = vmatprep.subr.mxu0 0.0
      %633 = vmatpush1.msra.mxu0 0.0
      %634 = vmatprep.subr.mxu0 0.0
      %635 = vmatpush1.msra.mxu0 0.0
      %636 = vmatprep.subr.mxu0 0.0
      %637 = vmatpush1.msra.mxu0 0.0
      %638 = vmatprep.subr.mxu0 0.0
      %639 = vmatpush1.msra.mxu0 0.0
      %640 = vmatprep.subr.mxu0 0.0
      %641 = vmatpush1.msra.mxu0 0.0
      %642 = vmatprep.subr.mxu0 0.0
      %643 = vmatpush1.msra.mxu0 0.0
      %644 = vmatprep.subr.mxu0 0.0
      %645 = vmatpush1.msra.mxu0 0.0
      %646 = vmatprep.subr.mxu0 0.0
      %647 = vmatpush1.msra.mxu0 0.0
      %648 = vmatprep.subr.mxu0 0.0
      %649 = vmatpush1.msra.mxu0 0.0
      %650 = vmatprep.subr.mxu0 0.0
      %651 = vmatpush1.msra.mxu0 0.0
      %652 = vmatprep.subr.mxu0 0.0
      %653 = vmatpush1.msra.mxu0 0.0
      %654 = vmatprep.subr.mxu0 0.0
      %655 = vmatpush1.msra.mxu0 0.0
      %656 = vmatprep.subr.mxu0 0.0
      %657 = vmatpush1.msra.mxu0 0.0
      %658 = vmatprep.subr.mxu0 %v625
      %659 = vmatpush1.msra.mxu0 %v622
      %660 = vmatprep.subr.mxu0 %v496
      %661 = vmatpush1.msra.mxu0 %v494
      %662 = vmatprep.subr.mxu0 0.0
      %663 = vmatpush2.msra.mxu0 0.0
      %664 = vmatprep.subr.mxu0 0.0
      %665 = vmatpush2.msra.mxu0 0.0
      %666 = vmatprep.subr.mxu0 0.0
      %667 = vmatpush2.msra.mxu0 0.0
      %668 = vmatprep.subr.mxu0 0.0
      %669 = vmatpush2.msra.mxu0 0.0
      %670 = vmatprep.subr.mxu0 0.0
      %671 = vmatpush2.msra.mxu0 0.0
      %672 = vmatprep.subr.mxu0 0.0
      %673 = vmatpush2.msra.mxu0 0.0
      %674 = vmatprep.subr.mxu0 0.0
      %675 = vmatpush2.msra.mxu0 0.0
      %676 = vmatprep.subr.mxu0 0.0
      %677 = vmatpush2.msra.mxu0 0.0
      %678 = vmatprep.subr.mxu0 0.0
      %679 = vmatpush2.msra.mxu0 0.0
      %680 = vmatprep.subr.mxu0 0.0
      %681 = vmatpush2.msra.mxu0 0.0
      %682 = vmatprep.subr.mxu0 0.0
      %683 = vmatpush2.msra.mxu0 0.0
      %684 = vmatprep.subr.mxu0 0.0
      %685 = vmatpush2.msra.mxu0 0.0
      %686 = vmatprep.subr.mxu0 0.0
      %687 = vmatpush2.msra.mxu0 0.0
      %688 = vmatprep.subr.mxu0 0.0
      %689 = vmatpush2.msra.mxu0 0.0
      %690 = vmatprep.subr.mxu0 0.0
      %691 = vmatpush2.msra.mxu0 0.0
      %692 = vmatprep.subr.mxu0 0.0
      %693 = vmatpush2.msra.mxu0 0.0
      %694 = vmatprep.mubr.f32.mxu0 0.0
      %695 = vmatmul.mubr.f32.gmra.mxu0 %v591
      %v696 = vpop.f32.mrf.mxu0
      %v697 = vadd.f32 0.0, %v696
      %v698 = vpop.f32.mrf.mxu0
      %v699 = vadd.f32 0.0, %v698
      %700 = vmatprep.mubr.f32.mxu0 0.0
      %701 = vmatmul.mubr.f32.gmra.mxu0 %v594
      %v702 = vpop.f32.mrf.mxu0
      %v703 = vadd.f32 0.0, %v702
      %v704 = vpop.f32.mrf.mxu0
      %v705 = vadd.f32 0.0, %v704
      %706 = vmatprep.mubr.f32.mxu0 0.0
      %707 = vmatmul.mubr.f32.gmra.mxu0 %v597
      %v708 = vpop.f32.mrf.mxu0
      %v709 = vadd.f32 0.0, %v708
      %v710 = vpop.f32.mrf.mxu0
      %v711 = vadd.f32 0.0, %v710
      %712 = vmatprep.mubr.f32.mxu0 0.0
      %713 = vmatmul.mubr.f32.gmra.mxu0 %v600
      %v714 = vpop.f32.mrf.mxu0
      %v715 = vadd.f32 0.0, %v714
      %v716 = vpop.f32.mrf.mxu0
      %v717 = vadd.f32 0.0, %v716
      %718 = vmatprep.mubr.f32.mxu0 0.0
      %719 = vmatmul.mubr.f32.gmra.mxu0 %v603
      %v720 = vpop.f32.mrf.mxu0
      %v721 = vadd.f32 0.0, %v720
      %v722 = vpop.f32.mrf.mxu0
      %v723 = vadd.f32 0.0, %v722
      %724 = vmatprep.mubr.f32.mxu0 0.0
      %725 = vmatmul.mubr.f32.gmra.mxu0 %v606
      %v726 = vpop.f32.mrf.mxu0
      %v727 = vadd.f32 0.0, %v726
      %v728 = vpop.f32.mrf.mxu0
      %v729 = vadd.f32 0.0, %v728
      %730 = vmatprep.mubr.f32.mxu0 0.0
      %731 = vmatmul.mubr.f32.gmra.mxu0 %v609
      %v732 = vpop.f32.mrf.mxu0
      %v733 = vadd.f32 0.0, %v732
      %v734 = vpop.f32.mrf.mxu0
      %v735 = vadd.f32 0.0, %v734
      %736 = vmatprep.mubr.f32.mxu0 0.0
      %737 = vmatmul.mubr.f32.gmra.mxu0 %v612
      %v738 = vpop.f32.mrf.mxu0
      %v739 = vadd.f32 0.0, %v738
      %v740 = vpop.f32.mrf.mxu0
      %v741 = vadd.f32 0.0, %v740
      %742 = vmatprep.mubr.f32.mxu0 0.0
      %743 = vmatmul.mubr.f32.gmra.mxu0 %v615
      %v744 = vpop.f32.mrf.mxu0
      %v745 = vadd.f32 0.0, %v744
      %v746 = vpop.f32.mrf.mxu0
      %v747 = vadd.f32 0.0, %v746
      %748 = vmatprep.mubr.f32.mxu0 0.0
      %749 = vmatmul.mubr.f32.gmra.mxu0 %v618
      %v750 = vpop.f32.mrf.mxu0
      %v751 = vadd.f32 0.0, %v750
      %v752 = vpop.f32.mrf.mxu0
      %v753 = vadd.f32 0.0, %v752
      %754 = vdwg.mxu0
      %755 = vmatprep.subr.mxu0 0.0
      %756 = vmatpush1.msra.mxu0 0.0
      %757 = vmatprep.subr.mxu0 0.0
      %758 = vmatpush1.msra.mxu0 0.0
      %759 = vmatprep.subr.mxu0 0.0
      %760 = vmatpush1.msra.mxu0 0.0
      %761 = vmatprep.subr.mxu0 0.0
      %762 = vmatpush1.msra.mxu0 0.0
      %763 = vmatprep.subr.mxu0 0.0
      %764 = vmatpush1.msra.mxu0 0.0
      %765 = vmatprep.subr.mxu0 0.0
      %766 = vmatpush1.msra.mxu0 0.0
      %767 = vmatprep.subr.mxu0 0.0
      %768 = vmatpush1.msra.mxu0 0.0
      %769 = vmatprep.subr.mxu0 0.0
      %770 = vmatpush1.msra.mxu0 0.0
      %771 = vmatprep.subr.mxu0 0.0
      %772 = vmatpush1.msra.mxu0 0.0
      %773 = vmatprep.subr.mxu0 0.0
      %774 = vmatpush1.msra.mxu0 0.0
      %775 = vmatprep.subr.mxu0 0.0
      %776 = vmatpush1.msra.mxu0 0.0
      %777 = vmatprep.subr.mxu0 0.0
      %778 = vmatpush1.msra.mxu0 0.0
      %779 = vmatprep.subr.mxu0 0.0
      %780 = vmatpush1.msra.mxu0 0.0
      %781 = vmatprep.subr.mxu0 0.0
      %782 = vmatpush1.msra.mxu0 0.0
      %783 = vmatprep.subr.mxu0 0.0
      %784 = vmatpush1.msra.mxu0 %v628
      %785 = vmatprep.subr.mxu0 0.0
      %786 = vmatpush1.msra.mxu0 %v571
      %787 = vmatprep.subr.mxu0 0.0
      %788 = vmatpush2.msra.mxu0 0.0
      %789 = vmatprep.subr.mxu0 0.0
      %790 = vmatpush2.msra.mxu0 0.0
      %791 = vmatprep.subr.mxu0 0.0
      %792 = vmatpush2.msra.mxu0 0.0
      %793 = vmatprep.subr.mxu0 0.0
      %794 = vmatpush2.msra.mxu0 0.0
      %795 = vmatprep.subr.mxu0 0.0
      %796 = vmatpush2.msra.mxu0 0.0
      %797 = vmatprep.subr.mxu0 0.0
      %798 = vmatpush2.msra.mxu0 0.0
      %799 = vmatprep.subr.mxu0 0.0
      %800 = vmatpush2.msra.mxu0 0.0
      %801 = vmatprep.subr.mxu0 0.0
      %802 = vmatpush2.msra.mxu0 0.0
      %803 = vmatprep.subr.mxu0 0.0
      %804 = vmatpush2.msra.mxu0 0.0
      %805 = vmatprep.subr.mxu0 0.0
      %806 = vmatpush2.msra.mxu0 0.0
      %807 = vmatprep.subr.mxu0 0.0
      %808 = vmatpush2.msra.mxu0 0.0
      %809 = vmatprep.subr.mxu0 0.0
      %810 = vmatpush2.msra.mxu0 0.0
      %811 = vmatprep.subr.mxu0 0.0
      %812 = vmatpush2.msra.mxu0 0.0
      %813 = vmatprep.subr.mxu0 0.0
      %814 = vmatpush2.msra.mxu0 0.0
      %815 = vmatprep.subr.mxu0 0.0
      %816 = vmatpush2.msra.mxu0 0.0
      %817 = vmatprep.subr.mxu0 0.0
      %818 = vmatpush2.msra.mxu0 0.0
      %819 = vmatprep.mubr.f32.mxu0 0.0
      %820 = vmatmul.mubr.f32.gmra.mxu0 %v591
      %v821 = vpop.f32.mrf.mxu0
      %v822 = vadd.f32 0.0, %v821
      %v823 = vpop.f32.mrf.mxu0
      %824 = vmatprep.mubr.f32.mxu0 0.0
      %825 = vmatmul.mubr.f32.gmra.mxu0 %v594
      %v826 = vpop.f32.mrf.mxu0
      %v827 = vadd.f32 0.0, %v826
      %v828 = vpop.f32.mrf.mxu0
      %829 = vmatprep.mubr.f32.mxu0 0.0
      %830 = vmatmul.mubr.f32.gmra.mxu0 %v597
      %v831 = vpop.f32.mrf.mxu0
      %v832 = vadd.f32 0.0, %v831
      %v833 = vpop.f32.mrf.mxu0
      %834 = vmatprep.mubr.f32.mxu0 0.0
      %835 = vmatmul.mubr.f32.gmra.mxu0 %v600
      %v836 = vpop.f32.mrf.mxu0
      %v837 = vadd.f32 0.0, %v836
      %v838 = vpop.f32.mrf.mxu0
      %839 = vmatprep.mubr.f32.mxu0 0.0
      %840 = vmatmul.mubr.f32.gmra.mxu0 %v603
      %v841 = vpop.f32.mrf.mxu0
      %v842 = vadd.f32 0.0, %v841
      %v843 = vpop.f32.mrf.mxu0
      %844 = vmatprep.mubr.f32.mxu0 0.0
      %845 = vmatmul.mubr.f32.gmra.mxu0 %v606
      %v846 = vpop.f32.mrf.mxu0
      %v847 = vadd.f32 0.0, %v846
      %v848 = vpop.f32.mrf.mxu0
      %849 = vmatprep.mubr.f32.mxu0 0.0
      %850 = vmatmul.mubr.f32.gmra.mxu0 %v609
      %v851 = vpop.f32.mrf.mxu0
      %v852 = vadd.f32 0.0, %v851
      %v853 = vpop.f32.mrf.mxu0
      %854 = vmatprep.mubr.f32.mxu0 0.0
      %855 = vmatmul.mubr.f32.gmra.mxu0 %v612
      %v856 = vpop.f32.mrf.mxu0
      %v857 = vadd.f32 0.0, %v856
      %v858 = vpop.f32.mrf.mxu0
      %859 = vmatprep.mubr.f32.mxu0 0.0
      %860 = vmatmul.mubr.f32.gmra.mxu0 %v615
      %v861 = vpop.f32.mrf.mxu0
      %v862 = vadd.f32 0.0, %v861
      %v863 = vpop.f32.mrf.mxu0
      %864 = vmatprep.mubr.f32.mxu0 0.0
      %865 = vmatmul.mubr.f32.gmra.mxu0 %v618
      %v866 = vpop.f32.mrf.mxu0
      %v867 = vadd.f32 0.0, %v866
      %v868 = vpop.f32.mrf.mxu0
      %869 = vdwg.mxu0
      %v870 = vld [vmem:[%s6] sm:$0xff]
      %v871 = vld [vmem:[%s6 + $0x8] sm:$0xff]
      %v872 = vld [vmem:[%s6 + $0x10] sm:$0xff]
      %v873 = vld [vmem:[%s6 + $0x18] sm:$0xff]
      %v874 = vld [vmem:[%s6 + $0x20] sm:$0xff]
      %v875 = vld [vmem:[%s6 + $0x28] sm:$0xff]
      %v876 = vld [vmem:[%s6 + $0x30] sm:$0xff]
      %v877 = vld [vmem:[%s6 + $0x38] sm:$0xff]
      %v878 = vld [vmem:[%s6 + $0x40] sm:$0xff]
      %v879 = vld [vmem:[%s6 + $0x48] sm:$0xff]
      %v880 = vmul.f32 %v697, %v870
      %v881 = vmul.f32 %v703, %v871
      %v882 = vmul.f32 %v709, %v872
      %v883 = vmul.f32 %v715, %v873
      %v884 = vmul.f32 %v721, %v874
      %v885 = vmul.f32 %v727, %v875
      %v886 = vmul.f32 %v733, %v876
      %v887 = vmul.f32 %v739, %v877
      %v888 = vmul.f32 %v745, %v878
      %v889 = vmul.f32 %v751, %v879
      %v890 = vmul.f32 %v699, %v870
      %v891 = vmul.f32 %v705, %v871
      %v892 = vmul.f32 %v711, %v872
      %v893 = vmul.f32 %v717, %v873
      %v894 = vmul.f32 %v723, %v874
      %v895 = vmul.f32 %v729, %v875
      %v896 = vmul.f32 %v735, %v876
      %v897 = vmul.f32 %v741, %v877
      %v898 = vmul.f32 %v747, %v878
      %v899 = vmul.f32 %v753, %v879
      %v900 = vmul.f32 %v822, %v870
      %v901 = vmul.f32 %v827, %v871
      %v902 = vmul.f32 %v832, %v872
      %v903 = vmul.f32 %v837, %v873
      %v904 = vmul.f32 %v842, %v874
      %v905 = vmul.f32 %v847, %v875
      %v906 = vmul.f32 %v852, %v876
      %v907 = vmul.f32 %v857, %v877
      %v908 = vmul.f32 %v862, %v878
      %v909 = vmul.f32 %v867, %v879
      %v910 = vld [vmem:[%s7] sm:$0xff]
      %v911 = vld [vmem:[%s7 + $0x8] sm:$0xff]
      %v912 = vld [vmem:[%s7 + $0x10] sm:$0xff]
      %v913 = vld [vmem:[%s7 + $0x18] sm:$0xff]
      %v914 = vld [vmem:[%s7 + $0x20] sm:$0xff]
      %v915 = vld [vmem:[%s7 + $0x28] sm:$0xff]
      %v916 = vld [vmem:[%s7 + $0x30] sm:$0xff]
      %v917 = vld [vmem:[%s7 + $0x38] sm:$0xff]
      %v918 = vld [vmem:[%s7 + $0x40] sm:$0xff]
      %v919 = vld [vmem:[%s7 + $0x48] sm:$0xff]
      %v920 = vld [vmem:[%s7 + $0x50] sm:$0xff]
      %v921 = vld [vmem:[%s7 + $0x58] sm:$0xff]
      %v922 = vld [vmem:[%s7 + $0x60] sm:$0xff]
      %v923 = vld [vmem:[%s7 + $0x68] sm:$0xff]
      %v924 = vld [vmem:[%s7 + $0x70] sm:$0xff]
      %v925 = vld [vmem:[%s7 + $0x78] sm:$0xff]
      %926 = vmatprep.subr.mxu0 0.0
      %927 = vmatpush1.msra.mxu0 %v925
      %928 = vmatprep.subr.mxu0 0.0
      %929 = vmatpush1.msra.mxu0 %v924
      %930 = vmatprep.subr.mxu0 0.0
      %931 = vmatpush1.msra.mxu0 %v923
      %932 = vmatprep.subr.mxu0 0.0
      %933 = vmatpush1.msra.mxu0 %v922
      %934 = vmatprep.subr.mxu0 0.0
      %935 = vmatpush1.msra.mxu0 %v921
      %936 = vmatprep.subr.mxu0 0.0
      %937 = vmatpush1.msra.mxu0 %v920
      %938 = vmatprep.subr.mxu0 0.0
      %939 = vmatpush1.msra.mxu0 %v919
      %940 = vmatprep.subr.mxu0 0.0
      %941 = vmatpush1.msra.mxu0 %v918
      %942 = vmatprep.subr.mxu0 0.0
      %943 = vmatpush1.msra.mxu0 %v917
      %944 = vmatprep.subr.mxu0 0.0
      %945 = vmatpush1.msra.mxu0 %v916
      %946 = vmatprep.subr.mxu0 0.0
      %947 = vmatpush1.msra.mxu0 %v915
      %948 = vmatprep.subr.mxu0 0.0
      %949 = vmatpush1.msra.mxu0 %v914
      %950 = vmatprep.subr.mxu0 0.0
      %951 = vmatpush1.msra.mxu0 %v913
      %952 = vmatprep.subr.mxu0 0.0
      %953 = vmatpush1.msra.mxu0 %v912
      %954 = vmatprep.subr.mxu0 0.0
      %955 = vmatpush1.msra.mxu0 %v911
      %956 = vmatprep.subr.mxu0 0.0
      %957 = vmatpush1.msra.mxu0 %v910
      %958 = vmatprep.subr.mxu0 0.0
      %959 = vmatpush2.msra.mxu0 0.0
      %960 = vmatprep.subr.mxu0 0.0
      %961 = vmatpush2.msra.mxu0 0.0
      %962 = vmatprep.subr.mxu0 0.0
      %963 = vmatpush2.msra.mxu0 0.0
      %964 = vmatprep.subr.mxu0 0.0
      %965 = vmatpush2.msra.mxu0 0.0
      %966 = vmatprep.subr.mxu0 0.0
      %967 = vmatpush2.msra.mxu0 0.0
      %968 = vmatprep.subr.mxu0 0.0
      %969 = vmatpush2.msra.mxu0 0.0
      %970 = vmatprep.subr.mxu0 0.0
      %971 = vmatpush2.msra.mxu0 0.0
      %972 = vmatprep.subr.mxu0 0.0
      %973 = vmatpush2.msra.mxu0 0.0
      %974 = vmatprep.subr.mxu0 0.0
      %975 = vmatpush2.msra.mxu0 0.0
      %976 = vmatprep.subr.mxu0 0.0
      %977 = vmatpush2.msra.mxu0 0.0
      %978 = vmatprep.subr.mxu0 0.0
      %979 = vmatpush2.msra.mxu0 0.0
      %980 = vmatprep.subr.mxu0 0.0
      %981 = vmatpush2.msra.mxu0 0.0
      %982 = vmatprep.subr.mxu0 0.0
      %983 = vmatpush2.msra.mxu0 0.0
      %984 = vmatprep.subr.mxu0 0.0
      %985 = vmatpush2.msra.mxu0 0.0
      %986 = vmatprep.subr.mxu0 0.0
      %987 = vmatpush2.msra.mxu0 0.0
      %988 = vmatprep.subr.mxu0 0.0
      %989 = vmatpush2.msra.mxu0 0.0
      %990 = vmatprep.mubr.f32.mxu0 0.0
      %991 = vmatmul.mubr.f32.gmra.mxu0 %v880
      %v992 = vpop.f32.mrf.mxu0
      %v993 = vadd.f32 0.0, %v992
      %v994 = vpop.f32.mrf.mxu0
      %995 = vmatprep.mubr.f32.mxu0 0.0
      %996 = vmatmul.mubr.f32.gmra.mxu0 %v881
      %v997 = vpop.f32.mrf.mxu0
      %v998 = vadd.f32 0.0, %v997
      %v999 = vpop.f32.mrf.mxu0
      %1000 = vmatprep.mubr.f32.mxu0 0.0
      %1001 = vmatmul.mubr.f32.gmra.mxu0 %v882
      %v1002 = vpop.f32.mrf.mxu0
      %v1003 = vadd.f32 0.0, %v1002
      %v1004 = vpop.f32.mrf.mxu0
      %1005 = vmatprep.mubr.f32.mxu0 0.0
      %1006 = vmatmul.mubr.f32.gmra.mxu0 %v883
      %v1007 = vpop.f32.mrf.mxu0
      %v1008 = vadd.f32 0.0, %v1007
      %v1009 = vpop.f32.mrf.mxu0
      %1010 = vmatprep.mubr.f32.mxu0 0.0
      %1011 = vmatmul.mubr.f32.gmra.mxu0 %v884
      %v1012 = vpop.f32.mrf.mxu0
      %v1013 = vadd.f32 0.0, %v1012
      %v1014 = vpop.f32.mrf.mxu0
      %1015 = vmatprep.mubr.f32.mxu0 0.0
      %1016 = vmatmul.mubr.f32.gmra.mxu0 %v885
      %v1017 = vpop.f32.mrf.mxu0
      %v1018 = vadd.f32 0.0, %v1017
      %v1019 = vpop.f32.mrf.mxu0
      %1020 = vmatprep.mubr.f32.mxu0 0.0
      %1021 = vmatmul.mubr.f32.gmra.mxu0 %v886
      %v1022 = vpop.f32.mrf.mxu0
      %v1023 = vadd.f32 0.0, %v1022
      %v1024 = vpop.f32.mrf.mxu0
      %1025 = vmatprep.mubr.f32.mxu0 0.0
      %1026 = vmatmul.mubr.f32.gmra.mxu0 %v887
      %v1027 = vpop.f32.mrf.mxu0
      %v1028 = vadd.f32 0.0, %v1027
      %v1029 = vpop.f32.mrf.mxu0
      %1030 = vmatprep.mubr.f32.mxu0 0.0
      %1031 = vmatmul.mubr.f32.gmra.mxu0 %v888
      %v1032 = vpop.f32.mrf.mxu0
      %v1033 = vadd.f32 0.0, %v1032
      %v1034 = vpop.f32.mrf.mxu0
      %1035 = vmatprep.mubr.f32.mxu0 0.0
      %1036 = vmatmul.mubr.f32.gmra.mxu0 %v889
      %v1037 = vpop.f32.mrf.mxu0
      %v1038 = vadd.f32 0.0, %v1037
      %v1039 = vpop.f32.mrf.mxu0
      %1040 = vdwg.mxu0
      %v1041 = vld [vmem:[%s8] sm:$0xff]
      %v1042 = vld [vmem:[%s8 + $0x8] sm:$0xff]
      %v1043 = vld [vmem:[%s8 + $0x10] sm:$0xff]
      %v1044 = vld [vmem:[%s8 + $0x18] sm:$0xff]
      %v1045 = vld [vmem:[%s8 + $0x20] sm:$0xff]
      %v1046 = vld [vmem:[%s8 + $0x28] sm:$0xff]
      %v1047 = vld [vmem:[%s8 + $0x30] sm:$0xff]
      %v1048 = vld [vmem:[%s8 + $0x38] sm:$0xff]
      %v1049 = vld [vmem:[%s8 + $0x40] sm:$0xff]
      %v1050 = vld [vmem:[%s8 + $0x48] sm:$0xff]
      %1051 = vmatprep.subr.mxu0 0.0
      %1052 = vmatpush1.xpose.msra.mxu0 0.0
      %1053 = vmatprep.subr.mxu0 0.0
      %1054 = vmatpush1.xpose.msra.mxu0 0.0
      %1055 = vmatprep.subr.mxu0 0.0
      %1056 = vmatpush1.xpose.msra.mxu0 0.0
      %1057 = vmatprep.subr.mxu0 0.0
      %1058 = vmatpush1.xpose.msra.mxu0 0.0
      %1059 = vmatprep.subr.mxu0 0.0
      %1060 = vmatpush1.xpose.msra.mxu0 0.0
      %1061 = vmatprep.subr.mxu0 0.0
      %1062 = vmatpush1.xpose.msra.mxu0 0.0
      %1063 = vmatprep.subr.mxu0 0.0
      %1064 = vmatpush1.xpose.msra.mxu0 %v899
      %1065 = vmatprep.subr.mxu0 0.0
      %1066 = vmatpush1.xpose.msra.mxu0 %v898
      %1067 = vmatprep.subr.mxu0 0.0
      %1068 = vmatpush1.xpose.msra.mxu0 %v897
      %1069 = vmatprep.subr.mxu0 0.0
      %1070 = vmatpush1.xpose.msra.mxu0 %v896
      %1071 = vmatprep.subr.mxu0 0.0
      %1072 = vmatpush1.xpose.msra.mxu0 %v895
      %1073 = vmatprep.subr.mxu0 0.0
      %1074 = vmatpush1.xpose.msra.mxu0 %v894
      %1075 = vmatprep.subr.mxu0 0.0
      %1076 = vmatpush1.xpose.msra.mxu0 %v893
      %1077 = vmatprep.subr.mxu0 0.0
      %1078 = vmatpush1.xpose.msra.mxu0 %v892
      %1079 = vmatprep.subr.mxu0 0.0
      %1080 = vmatpush1.xpose.msra.mxu0 %v891
      %1081 = vmatprep.subr.mxu0 0.0
      %1082 = vmatpush1.xpose.msra.mxu0 %v890
      %1083 = vmatprep.subr.mxu0 0.0
      %1084 = vmatpush2.xpose.msra.mxu0 0.0
      %1085 = vmatprep.subr.mxu0 0.0
      %1086 = vmatpush2.xpose.msra.mxu0 0.0
      %1087 = vmatprep.subr.mxu0 0.0
      %1088 = vmatpush2.xpose.msra.mxu0 0.0
      %1089 = vmatprep.subr.mxu0 0.0
      %1090 = vmatpush2.xpose.msra.mxu0 0.0
      %1091 = vmatprep.subr.mxu0 0.0
      %1092 = vmatpush2.xpose.msra.mxu0 0.0
      %1093 = vmatprep.subr.mxu0 0.0
      %1094 = vmatpush2.xpose.msra.mxu0 0.0
      %1095 = vmatprep.subr.mxu0 0.0
      %1096 = vmatpush2.xpose.msra.mxu0 0.0
      %1097 = vmatprep.subr.mxu0 0.0
      %1098 = vmatpush2.xpose.msra.mxu0 0.0
      %1099 = vmatprep.subr.mxu0 0.0
      %1100 = vmatpush2.xpose.msra.mxu0 0.0
      %1101 = vmatprep.subr.mxu0 0.0
      %1102 = vmatpush2.xpose.msra.mxu0 0.0
      %1103 = vmatprep.subr.mxu0 0.0
      %1104 = vmatpush2.xpose.msra.mxu0 0.0
      %1105 = vmatprep.subr.mxu0 0.0
      %1106 = vmatpush2.xpose.msra.mxu0 0.0
      %1107 = vmatprep.subr.mxu0 0.0
      %1108 = vmatpush2.xpose.msra.mxu0 0.0
      %1109 = vmatprep.subr.mxu0 0.0
      %1110 = vmatpush2.xpose.msra.mxu0 0.0
      %1111 = vmatprep.subr.mxu0 0.0
      %1112 = vmatpush2.xpose.msra.mxu0 0.0
      %1113 = vmatprep.subr.mxu0 0.0
      %1114 = vmatpush2.xpose.msra.mxu0 0.0
      %1115 = vmatprep.mubr.f32.mxu0 0.0
      %1116 = vmatmul.mubr.f32.gmra.mxu0 %v993
      %v1117 = vpop.f32.mrf.mxu0
      %v1118 = vadd.f32 %v1041, %v1117
      %v1119 = vpop.f32.mrf.mxu0
      %1120 = vmatprep.mubr.f32.mxu0 0.0
      %1121 = vmatmul.mubr.f32.gmra.mxu0 %v998
      %v1122 = vpop.f32.mrf.mxu0
      %v1123 = vadd.f32 %v1042, %v1122
      %v1124 = vpop.f32.mrf.mxu0
      %1125 = vmatprep.mubr.f32.mxu0 0.0
      %1126 = vmatmul.mubr.f32.gmra.mxu0 %v1003
      %v1127 = vpop.f32.mrf.mxu0
      %v1128 = vadd.f32 %v1043, %v1127
      %v1129 = vpop.f32.mrf.mxu0
      %1130 = vmatprep.mubr.f32.mxu0 0.0
      %1131 = vmatmul.mubr.f32.gmra.mxu0 %v1008
      %v1132 = vpop.f32.mrf.mxu0
      %v1133 = vadd.f32 %v1044, %v1132
      %v1134 = vpop.f32.mrf.mxu0
      %1135 = vmatprep.mubr.f32.mxu0 0.0
      %1136 = vmatmul.mubr.f32.gmra.mxu0 %v1013
      %v1137 = vpop.f32.mrf.mxu0
      %v1138 = vadd.f32 %v1045, %v1137
      %v1139 = vpop.f32.mrf.mxu0
      %1140 = vmatprep.mubr.f32.mxu0 0.0
      %1141 = vmatmul.mubr.f32.gmra.mxu0 %v1018
      %v1142 = vpop.f32.mrf.mxu0
      %v1143 = vadd.f32 %v1046, %v1142
      %v1144 = vpop.f32.mrf.mxu0
      %1145 = vmatprep.mubr.f32.mxu0 0.0
      %1146 = vmatmul.mubr.f32.gmra.mxu0 %v1023
      %v1147 = vpop.f32.mrf.mxu0
      %v1148 = vadd.f32 %v1047, %v1147
      %v1149 = vpop.f32.mrf.mxu0
      %1150 = vmatprep.mubr.f32.mxu0 0.0
      %1151 = vmatmul.mubr.f32.gmra.mxu0 %v1028
      %v1152 = vpop.f32.mrf.mxu0
      %v1153 = vadd.f32 %v1048, %v1152
      %v1154 = vpop.f32.mrf.mxu0
      %1155 = vmatprep.mubr.f32.mxu0 0.0
      %1156 = vmatmul.mubr.f32.gmra.mxu0 %v1033
      %v1157 = vpop.f32.mrf.mxu0
      %v1158 = vadd.f32 %v1049, %v1157
      %v1159 = vpop.f32.mrf.mxu0
      %1160 = vmatprep.mubr.f32.mxu0 0.0
      %1161 = vmatmul.mubr.f32.gmra.mxu0 %v1038
      %v1162 = vpop.f32.mrf.mxu0
      %v1163 = vadd.f32 %v1050, %v1162
      %v1164 = vpop.f32.mrf.mxu0
      %1165 = vdwg.mxu0
      %vm1166 = vcmask 654336
      %v1167 = vsel %vm1166, %v1118, -inf
      %1168 = vmax.xlane.f32.xlu0 %v1167
      %v1169 = vpop.xlane.xlu0 %1168
      %v1170 = vsel %vm1166, %v1123, -inf
      %1171 = vmax.xlane.f32.xlu0 %v1170
      %v1172 = vpop.xlane.xlu0 %1171
      %v1173 = vsel %vm1166, %v1128, -inf
      %1174 = vmax.xlane.f32.xlu0 %v1173
      %v1175 = vpop.xlane.xlu0 %1174
      %v1176 = vsel %vm1166, %v1133, -inf
      %1177 = vmax.xlane.f32.xlu0 %v1176
      %v1178 = vpop.xlane.xlu0 %1177
      %v1179 = vsel %vm1166, %v1138, -inf
      %1180 = vmax.xlane.f32.xlu0 %v1179
      %v1181 = vpop.xlane.xlu0 %1180
      %v1182 = vsel %vm1166, %v1143, -inf
      %1183 = vmax.xlane.f32.xlu0 %v1182
      %v1184 = vpop.xlane.xlu0 %1183
      %v1185 = vsel %vm1166, %v1148, -inf
      %1186 = vmax.xlane.f32.xlu0 %v1185
      %v1187 = vpop.xlane.xlu0 %1186
      %v1188 = vsel %vm1166, %v1153, -inf
      %1189 = vmax.xlane.f32.xlu0 %v1188
      %v1190 = vpop.xlane.xlu0 %1189
      %v1191 = vsel %vm1166, %v1158, -inf
      %1192 = vmax.xlane.f32.xlu0 %v1191
      %v1193 = vpop.xlane.xlu0 %1192
      %v1194 = vsel %vm1166, %v1163, -inf
      %1195 = vmax.xlane.f32.xlu0 %v1194
      %v1196 = vpop.xlane.xlu0 %1195
      %v1197 = vsub.f32 %v1118, %v1169
      %v1198 = vsub.f32 %v1123, %v1172
      %v1199 = vsub.f32 %v1128, %v1175
      %v1200 = vsub.f32 %v1133, %v1178
      %v1201 = vsub.f32 %v1138, %v1181
      %v1202 = vsub.f32 %v1143, %v1184
      %v1203 = vsub.f32 %v1148, %v1187
      %v1204 = vsub.f32 %v1153, %v1190
      %v1205 = vsub.f32 %v1158, %v1193
      %v1206 = vsub.f32 %v1163, %v1196
      %v1207 = vmul.f32 %v1197, 1.442695
      %v1208 = vpow.pop %v1207
      %v1209 = vmul.f32 %v1198, 1.442695
      %v1210 = vpow.pop %v1209
      %v1211 = vmul.f32 %v1199, 1.442695
      %v1212 = vpow.pop %v1211
      %v1213 = vmul.f32 %v1200, 1.442695
      %v1214 = vpow.pop %v1213
      %v1215 = vmul.f32 %v1201, 1.442695
      %v1216 = vpow.pop %v1215
      %v1217 = vmul.f32 %v1202, 1.442695
      %v1218 = vpow.pop %v1217
      %v1219 = vmul.f32 %v1203, 1.442695
      %v1220 = vpow.pop %v1219
      %v1221 = vmul.f32 %v1204, 1.442695
      %v1222 = vpow.pop %v1221
      %v1223 = vmul.f32 %v1205, 1.442695
      %v1224 = vpow.pop %v1223
      %v1225 = vmul.f32 %v1206, 1.442695
      %v1226 = vpow.pop %v1225
      %v1227 = vsel %vm1166, %v1208, 0.0
      %1228 = vadd.xlane.f32.xlu0 %v1227
      %v1229 = vpop.xlane.xlu0 %1228
      %v1230 = vsel %vm1166, %v1210, 0.0
      %1231 = vadd.xlane.f32.xlu0 %v1230
      %v1232 = vpop.xlane.xlu0 %1231
      %v1233 = vsel %vm1166, %v1212, 0.0
      %1234 = vadd.xlane.f32.xlu0 %v1233
      %v1235 = vpop.xlane.xlu0 %1234
      %v1236 = vsel %vm1166, %v1214, 0.0
      %1237 = vadd.xlane.f32.xlu0 %v1236
      %v1238 = vpop.xlane.xlu0 %1237
      %v1239 = vsel %vm1166, %v1216, 0.0
      %1240 = vadd.xlane.f32.xlu0 %v1239
      %v1241 = vpop.xlane.xlu0 %1240
      %v1242 = vsel %vm1166, %v1218, 0.0
      %1243 = vadd.xlane.f32.xlu0 %v1242
      %v1244 = vpop.xlane.xlu0 %1243
      %v1245 = vsel %vm1166, %v1220, 0.0
      %1246 = vadd.xlane.f32.xlu0 %v1245
      %v1247 = vpop.xlane.xlu0 %1246
      %v1248 = vsel %vm1166, %v1222, 0.0
      %1249 = vadd.xlane.f32.xlu0 %v1248
      %v1250 = vpop.xlane.xlu0 %1249
      %v1251 = vsel %vm1166, %v1224, 0.0
      %1252 = vadd.xlane.f32.xlu0 %v1251
      %v1253 = vpop.xlane.xlu0 %1252
      %v1254 = vsel %vm1166, %v1226, 0.0
      %1255 = vadd.xlane.f32.xlu0 %v1254
      %v1256 = vpop.xlane.xlu0 %1255
      %v1257 = vrcp.pop %v1229
      %v1258 = vmul.f32 %v1208, %v1257
      %v1259 = vrcp.pop %v1232
      %v1260 = vmul.f32 %v1210, %v1259
      %v1261 = vrcp.pop %v1235
      %v1262 = vmul.f32 %v1212, %v1261
      %v1263 = vrcp.pop %v1238
      %v1264 = vmul.f32 %v1214, %v1263
      %v1265 = vrcp.pop %v1241
      %v1266 = vmul.f32 %v1216, %v1265
      %v1267 = vrcp.pop %v1244
      %v1268 = vmul.f32 %v1218, %v1267
      %v1269 = vrcp.pop %v1247
      %v1270 = vmul.f32 %v1220, %v1269
      %v1271 = vrcp.pop %v1250
      %v1272 = vmul.f32 %v1222, %v1271
      %v1273 = vrcp.pop %v1253
      %v1274 = vmul.f32 %v1224, %v1273
      %v1275 = vrcp.pop %v1256
      %v1276 = vmul.f32 %v1226, %v1275
      %1277 = vmatprep.subr.mxu0 0.0
      %1278 = vmatpush1.msra.mxu0 %v925
      %1279 = vmatprep.subr.mxu0 0.0
      %1280 = vmatpush1.msra.mxu0 %v924
      %1281 = vmatprep.subr.mxu0 0.0
      %1282 = vmatpush1.msra.mxu0 %v923
      %1283 = vmatprep.subr.mxu0 0.0
      %1284 = vmatpush1.msra.mxu0 %v922
      %1285 = vmatprep.subr.mxu0 0.0
      %1286 = vmatpush1.msra.mxu0 %v921
      %1287 = vmatprep.subr.mxu0 0.0
      %1288 = vmatpush1.msra.mxu0 %v920
      %1289 = vmatprep.subr.mxu0 0.0
      %1290 = vmatpush1.msra.mxu0 %v919
      %1291 = vmatprep.subr.mxu0 0.0
      %1292 = vmatpush1.msra.mxu0 %v918
      %1293 = vmatprep.subr.mxu0 0.0
      %1294 = vmatpush1.msra.mxu0 %v917
      %1295 = vmatprep.subr.mxu0 0.0
      %1296 = vmatpush1.msra.mxu0 %v916
      %1297 = vmatprep.subr.mxu0 0.0
      %1298 = vmatpush1.msra.mxu0 %v915
      %1299 = vmatprep.subr.mxu0 0.0
      %1300 = vmatpush1.msra.mxu0 %v914
      %1301 = vmatprep.subr.mxu0 0.0
      %1302 = vmatpush1.msra.mxu0 %v913
      %1303 = vmatprep.subr.mxu0 0.0
      %1304 = vmatpush1.msra.mxu0 %v912
      %1305 = vmatprep.subr.mxu0 0.0
      %1306 = vmatpush1.msra.mxu0 %v911
      %1307 = vmatprep.subr.mxu0 0.0
      %1308 = vmatpush1.msra.mxu0 %v910
      %1309 = vmatprep.subr.mxu0 0.0
      %1310 = vmatpush2.msra.mxu0 0.0
      %1311 = vmatprep.subr.mxu0 0.0
      %1312 = vmatpush2.msra.mxu0 0.0
      %1313 = vmatprep.subr.mxu0 0.0
      %1314 = vmatpush2.msra.mxu0 0.0
      %1315 = vmatprep.subr.mxu0 0.0
      %1316 = vmatpush2.msra.mxu0 0.0
      %1317 = vmatprep.subr.mxu0 0.0
      %1318 = vmatpush2.msra.mxu0 0.0
      %1319 = vmatprep.subr.mxu0 0.0
      %1320 = vmatpush2.msra.mxu0 0.0
      %1321 = vmatprep.subr.mxu0 0.0
      %1322 = vmatpush2.msra.mxu0 0.0
      %1323 = vmatprep.subr.mxu0 0.0
      %1324 = vmatpush2.msra.mxu0 0.0
      %1325 = vmatprep.subr.mxu0 0.0
      %1326 = vmatpush2.msra.mxu0 0.0
      %1327 = vmatprep.subr.mxu0 0.0
      %1328 = vmatpush2.msra.mxu0 0.0
      %1329 = vmatprep.subr.mxu0 0.0
      %1330 = vmatpush2.msra.mxu0 0.0
      %1331 = vmatprep.subr.mxu0 0.0
      %1332 = vmatpush2.msra.mxu0 0.0
      %1333 = vmatprep.subr.mxu0 0.0
      %1334 = vmatpush2.msra.mxu0 0.0
      %1335 = vmatprep.subr.mxu0 0.0
      %1336 = vmatpush2.msra.mxu0 0.0
      %1337 = vmatprep.subr.mxu0 0.0
      %1338 = vmatpush2.msra.mxu0 0.0
      %1339 = vmatprep.subr.mxu0 0.0
      %1340 = vmatpush2.msra.mxu0 0.0
      %1341 = vmatprep.mubr.f32.mxu0 0.0
      %1342 = vmatmul.mubr.f32.gmra.mxu0 %v900
      %v1343 = vpop.f32.mrf.mxu0
      %v1344 = vadd.f32 0.0, %v1343
      %v1345 = vpop.f32.mrf.mxu0
      %1346 = vmatprep.mubr.f32.mxu0 0.0
      %1347 = vmatmul.mubr.f32.gmra.mxu0 %v901
      %v1348 = vpop.f32.mrf.mxu0
      %v1349 = vadd.f32 0.0, %v1348
      %v1350 = vpop.f32.mrf.mxu0
      %1351 = vmatprep.mubr.f32.mxu0 0.0
      %1352 = vmatmul.mubr.f32.gmra.mxu0 %v902
      %v1353 = vpop.f32.mrf.mxu0
      %v1354 = vadd.f32 0.0, %v1353
      %v1355 = vpop.f32.mrf.mxu0
      %1356 = vmatprep.mubr.f32.mxu0 0.0
      %1357 = vmatmul.mubr.f32.gmra.mxu0 %v903
      %v1358 = vpop.f32.mrf.mxu0
      %v1359 = vadd.f32 0.0, %v1358
      %v1360 = vpop.f32.mrf.mxu0
      %1361 = vmatprep.mubr.f32.mxu0 0.0
      %1362 = vmatmul.mubr.f32.gmra.mxu0 %v904
      %v1363 = vpop.f32.mrf.mxu0
      %v1364 = vadd.f32 0.0, %v1363
      %v1365 = vpop.f32.mrf.mxu0
      %1366 = vmatprep.mubr.f32.mxu0 0.0
      %1367 = vmatmul.mubr.f32.gmra.mxu0 %v905
      %v1368 = vpop.f32.mrf.mxu0
      %v1369 = vadd.f32 0.0, %v1368
      %v1370 = vpop.f32.mrf.mxu0
      %1371 = vmatprep.mubr.f32.mxu0 0.0
      %1372 = vmatmul.mubr.f32.gmra.mxu0 %v906
      %v1373 = vpop.f32.mrf.mxu0
      %v1374 = vadd.f32 0.0, %v1373
      %v1375 = vpop.f32.mrf.mxu0
      %1376 = vmatprep.mubr.f32.mxu0 0.0
      %1377 = vmatmul.mubr.f32.gmra.mxu0 %v907
      %v1378 = vpop.f32.mrf.mxu0
      %v1379 = vadd.f32 0.0, %v1378
      %v1380 = vpop.f32.mrf.mxu0
      %1381 = vmatprep.mubr.f32.mxu0 0.0
      %1382 = vmatmul.mubr.f32.gmra.mxu0 %v908
      %v1383 = vpop.f32.mrf.mxu0
      %v1384 = vadd.f32 0.0, %v1383
      %v1385 = vpop.f32.mrf.mxu0
      %1386 = vmatprep.mubr.f32.mxu0 0.0
      %1387 = vmatmul.mubr.f32.gmra.mxu0 %v909
      %v1388 = vpop.f32.mrf.mxu0
      %v1389 = vadd.f32 0.0, %v1388
      %v1390 = vpop.f32.mrf.mxu0
      %1391 = vdwg.mxu0
      %v1393 = vsel %vm1166, %v1258, 0
      %v1396 = vsel %vm1166, %v1260, 0
      %v1399 = vsel %vm1166, %v1262, 0
      %v1402 = vsel %vm1166, %v1264, 0
      %v1405 = vsel %vm1166, %v1266, 0
      %v1408 = vsel %vm1166, %v1268, 0
      %v1411 = vsel %vm1166, %v1270, 0
      %v1414 = vsel %vm1166, %v1272, 0
      %v1417 = vsel %vm1166, %v1274, 0
      %v1420 = vsel %vm1166, %v1276, 0
      %1422 = vmatprep.subr.mxu0 0.0
      %1423 = vmatpush1.msra.mxu0 0.0
      %1424 = vmatprep.subr.mxu0 0.0
      %1425 = vmatpush1.msra.mxu0 0.0
      %1426 = vmatprep.subr.mxu0 0.0
      %1427 = vmatpush1.msra.mxu0 0.0
      %1428 = vmatprep.subr.mxu0 0.0
      %1429 = vmatpush1.msra.mxu0 0.0
      %1430 = vmatprep.subr.mxu0 0.0
      %1431 = vmatpush1.msra.mxu0 0.0
      %1432 = vmatprep.subr.mxu0 0.0
      %1433 = vmatpush1.msra.mxu0 0.0
      %1434 = vmatprep.subr.mxu0 0.0
      %1435 = vmatpush1.msra.mxu0 %v1389
      %1436 = vmatprep.subr.mxu0 0.0
      %1437 = vmatpush1.msra.mxu0 %v1384
      %1438 = vmatprep.subr.mxu0 0.0
      %1439 = vmatpush1.msra.mxu0 %v1379
      %1440 = vmatprep.subr.mxu0 0.0
      %1441 = vmatpush1.msra.mxu0 %v1374
      %1442 = vmatprep.subr.mxu0 0.0
      %1443 = vmatpush1.msra.mxu0 %v1369
      %1444 = vmatprep.subr.mxu0 0.0
      %1445 = vmatpush1.msra.mxu0 %v1364
      %1446 = vmatprep.subr.mxu0 0.0
      %1447 = vmatpush1.msra.mxu0 %v1359
      %1448 = vmatprep.subr.mxu0 0.0
      %1449 = vmatpush1.msra.mxu0 %v1354
      %1450 = vmatprep.subr.mxu0 0.0
      %1451 = vmatpush1.msra.mxu0 %v1349
      %1452 = vmatprep.subr.mxu0 0.0
      %1453 = vmatpush1.msra.mxu0 %v1344
      %1454 = vmatprep.subr.mxu0 0.0
      %1455 = vmatpush2.msra.mxu0 0.0
      %1456 = vmatprep.subr.mxu0 0.0
      %1457 = vmatpush2.msra.mxu0 0.0
      %1458 = vmatprep.subr.mxu0 0.0
      %1459 = vmatpush2.msra.mxu0 0.0
      %1460 = vmatprep.subr.mxu0 0.0
      %1461 = vmatpush2.msra.mxu0 0.0
      %1462 = vmatprep.subr.mxu0 0.0
      %1463 = vmatpush2.msra.mxu0 0.0
      %1464 = vmatprep.subr.mxu0 0.0
      %1465 = vmatpush2.msra.mxu0 0.0
      %1466 = vmatprep.subr.mxu0 0.0
      %1467 = vmatpush2.msra.mxu0 0.0
      %1468 = vmatprep.subr.mxu0 0.0
      %1469 = vmatpush2.msra.mxu0 0.0
      %1470 = vmatprep.subr.mxu0 0.0
      %1471 = vmatpush2.msra.mxu0 0.0
      %1472 = vmatprep.subr.mxu0 0.0
      %1473 = vmatpush2.msra.mxu0 0.0
      %1474 = vmatprep.subr.mxu0 0.0
      %1475 = vmatpush2.msra.mxu0 0.0
      %1476 = vmatprep.subr.mxu0 0.0
      %1477 = vmatpush2.msra.mxu0 0.0
      %1478 = vmatprep.subr.mxu0 0.0
      %1479 = vmatpush2.msra.mxu0 0.0
      %1480 = vmatprep.subr.mxu0 0.0
      %1481 = vmatpush2.msra.mxu0 0.0
      %1482 = vmatprep.subr.mxu0 0.0
      %1483 = vmatpush2.msra.mxu0 0.0
      %1484 = vmatprep.subr.mxu0 0.0
      %1485 = vmatpush2.msra.mxu0 0.0
      %1486 = vmatprep.mubr.f32.mxu0 0.0
      %1487 = vmatmul.mubr.f32.gmra.mxu0 %v1393
      %v1488 = vpop.f32.mrf.mxu0
      %v1489 = vadd.f32 0.0, %v1488
      %v1490 = vpop.f32.mrf.mxu0
      %1491 = vmatprep.mubr.f32.mxu0 0.0
      %1492 = vmatmul.mubr.f32.gmra.mxu0 %v1396
      %v1493 = vpop.f32.mrf.mxu0
      %v1494 = vadd.f32 0.0, %v1493
      %v1495 = vpop.f32.mrf.mxu0
      %1496 = vmatprep.mubr.f32.mxu0 0.0
      %1497 = vmatmul.mubr.f32.gmra.mxu0 %v1399
      %v1498 = vpop.f32.mrf.mxu0
      %v1499 = vadd.f32 0.0, %v1498
      %v1500 = vpop.f32.mrf.mxu0
      %1501 = vmatprep.mubr.f32.mxu0 0.0
      %1502 = vmatmul.mubr.f32.gmra.mxu0 %v1402
      %v1503 = vpop.f32.mrf.mxu0
      %v1504 = vadd.f32 0.0, %v1503
      %v1505 = vpop.f32.mrf.mxu0
      %1506 = vmatprep.mubr.f32.mxu0 0.0
      %1507 = vmatmul.mubr.f32.gmra.mxu0 %v1405
      %v1508 = vpop.f32.mrf.mxu0
      %v1509 = vadd.f32 0.0, %v1508
      %v1510 = vpop.f32.mrf.mxu0
      %1511 = vmatprep.mubr.f32.mxu0 0.0
      %1512 = vmatmul.mubr.f32.gmra.mxu0 %v1408
      %v1513 = vpop.f32.mrf.mxu0
      %v1514 = vadd.f32 0.0, %v1513
      %v1515 = vpop.f32.mrf.mxu0
      %1516 = vmatprep.mubr.f32.mxu0 0.0
      %1517 = vmatmul.mubr.f32.gmra.mxu0 %v1411
      %v1518 = vpop.f32.mrf.mxu0
      %v1519 = vadd.f32 0.0, %v1518
      %v1520 = vpop.f32.mrf.mxu0
      %1521 = vmatprep.mubr.f32.mxu0 0.0
      %1522 = vmatmul.mubr.f32.gmra.mxu0 %v1414
      %v1523 = vpop.f32.mrf.mxu0
      %v1524 = vadd.f32 0.0, %v1523
      %v1525 = vpop.f32.mrf.mxu0
      %1526 = vmatprep.mubr.f32.mxu0 0.0
      %1527 = vmatmul.mubr.f32.gmra.mxu0 %v1417
      %v1528 = vpop.f32.mrf.mxu0
      %v1529 = vadd.f32 0.0, %v1528
      %v1530 = vpop.f32.mrf.mxu0
      %1531 = vmatprep.mubr.f32.mxu0 0.0
      %1532 = vmatmul.mubr.f32.gmra.mxu0 %v1420
      %v1533 = vpop.f32.mrf.mxu0
      %v1534 = vadd.f32 0.0, %v1533
      %v1535 = vpop.f32.mrf.mxu0
      %1536 = vdwg.mxu0
      %v1537 = vld [vmem:[%s9] sm:$0xff]
      %v1538 = vld [vmem:[%s9 + $0x8] sm:$0x3]
      %v1539 = vmul.f32 %v1489, %v870
      %v1540 = vmul.f32 %v1494, %v871
      %v1541 = vmul.f32 %v1499, %v872
      %v1542 = vmul.f32 %v1504, %v873
      %v1543 = vmul.f32 %v1509, %v874
      %v1544 = vmul.f32 %v1514, %v875
      %v1545 = vmul.f32 %v1519, %v876
      %v1546 = vmul.f32 %v1524, %v877
      %v1547 = vmul.f32 %v1529, %v878
      %v1548 = vmul.f32 %v1534, %v879
      %v1550 = vsel %vm1166, %v1537, 0
      %v1553 = vsel %vm1166, %v1538, 0
      %1555 = vmatprep.subr.mxu0 0.0
      %1556 = vmatpush1.msra.mxu0 0.0
      %1557 = vmatprep.subr.mxu0 0.0
      %1558 = vmatpush1.msra.mxu0 0.0
      %1559 = vmatprep.subr.mxu0 0.0
      %1560 = vmatpush1.msra.mxu0 0.0
      %1561 = vmatprep.subr.mxu0 0.0
      %1562 = vmatpush1.msra.mxu0 0.0
      %1563 = vmatprep.subr.mxu0 0.0
      %1564 = vmatpush1.msra.mxu0 0.0
      %1565 = vmatprep.subr.mxu0 0.0
      %1566 = vmatpush1.msra.mxu0 0.0
      %1567 = vmatprep.subr.mxu0 0.0
      %1568 = vmatpush1.msra.mxu0 %v1548
      %1569 = vmatprep.subr.mxu0 0.0
      %1570 = vmatpush1.msra.mxu0 %v1547
      %1571 = vmatprep.subr.mxu0 0.0
      %1572 = vmatpush1.msra.mxu0 %v1546
      %1573 = vmatprep.subr.mxu0 0.0
      %1574 = vmatpush1.msra.mxu0 %v1545
      %1575 = vmatprep.subr.mxu0 0.0
      %1576 = vmatpush1.msra.mxu0 %v1544
      %1577 = vmatprep.subr.mxu0 0.0
      %1578 = vmatpush1.msra.mxu0 %v1543
      %1579 = vmatprep.subr.mxu0 0.0
      %1580 = vmatpush1.msra.mxu0 %v1542
      %1581 = vmatprep.subr.mxu0 0.0
      %1582 = vmatpush1.msra.mxu0 %v1541
      %1583 = vmatprep.subr.mxu0 0.0
      %1584 = vmatpush1.msra.mxu0 %v1540
      %1585 = vmatprep.subr.mxu0 0.0
      %1586 = vmatpush1.msra.mxu0 %v1539
      %1587 = vmatprep.subr.mxu0 0.0
      %1588 = vmatpush2.msra.mxu0 0.0
      %1589 = vmatprep.subr.mxu0 0.0
      %1590 = vmatpush2.msra.mxu0 0.0
      %1591 = vmatprep.subr.mxu0 0.0
      %1592 = vmatpush2.msra.mxu0 0.0
      %1593 = vmatprep.subr.mxu0 0.0
      %1594 = vmatpush2.msra.mxu0 0.0
      %1595 = vmatprep.subr.mxu0 0.0
      %1596 = vmatpush2.msra.mxu0 0.0
      %1597 = vmatprep.subr.mxu0 0.0
      %1598 = vmatpush2.msra.mxu0 0.0
      %1599 = vmatprep.subr.mxu0 0.0
      %1600 = vmatpush2.msra.mxu0 0.0
      %1601 = vmatprep.subr.mxu0 0.0
      %1602 = vmatpush2.msra.mxu0 0.0
      %1603 = vmatprep.subr.mxu0 0.0
      %1604 = vmatpush2.msra.mxu0 0.0
      %1605 = vmatprep.subr.mxu0 0.0
      %1606 = vmatpush2.msra.mxu0 0.0
      %1607 = vmatprep.subr.mxu0 0.0
      %1608 = vmatpush2.msra.mxu0 0.0
      %1609 = vmatprep.subr.mxu0 0.0
      %1610 = vmatpush2.msra.mxu0 0.0
      %1611 = vmatprep.subr.mxu0 0.0
      %1612 = vmatpush2.msra.mxu0 0.0
      %1613 = vmatprep.subr.mxu0 0.0
      %1614 = vmatpush2.msra.mxu0 0.0
      %1615 = vmatprep.subr.mxu0 0.0
      %1616 = vmatpush2.msra.mxu0 0.0
      %1617 = vmatprep.subr.mxu0 0.0
      %1618 = vmatpush2.msra.mxu0 0.0
      %1619 = vmatprep.mubr.f32.mxu0 0.0
      %1620 = vmatmul.mubr.f32.gmra.mxu0 %v1550
      %v1621 = vpop.f32.mrf.mxu0
      %v1622 = vadd.f32 0.0, %v1621
      %v1623 = vpop.f32.mrf.mxu0
      %1624 = vmatprep.mubr.f32.mxu0 0.0
      %1625 = vmatmul.mubr.f32.gmra.mxu0 %v1553
      %v1626 = vpop.f32.mrf.mxu0
      %v1627 = vadd.f32 0.0, %v1626
      %v1628 = vpop.f32.mrf.mxu0
      %1629 = vdwg.mxu0
      %v1630 = vld [vmem:[%s3] sm:$0xff]
      %v1631 = vld [vmem:[%s3 + $0x8] sm:$0xff]
      %v1632 = vld [vmem:[%s3 + $0x10] sm:$0xff]
      %v1633 = vld [vmem:[%s3 + $0x18] sm:$0xff]
      %v1634 = vld [vmem:[%s3 + $0x20] sm:$0xff]
      %v1635 = vld [vmem:[%s3 + $0x28] sm:$0xff]
      %v1636 = vld [vmem:[%s3 + $0x30] sm:$0xff]
      %v1637 = vld [vmem:[%s3 + $0x38] sm:$0xff]
      %v1638 = vld [vmem:[%s3 + $0x40] sm:$0xff]
      %v1639 = vld [vmem:[%s3 + $0x48] sm:$0xff]
      %v1640 = vld [vmem:[%s3 + $0x50] sm:$0xff]
      %v1641 = vld [vmem:[%s3 + $0x58] sm:$0xff]
      %v1642 = vld [vmem:[%s3 + $0x60] sm:$0xff]
      %v1643 = vld [vmem:[%s3 + $0x68] sm:$0xff]
      %v1644 = vld [vmem:[%s3 + $0x70] sm:$0xff]
      %v1645 = vld [vmem:[%s3 + $0x78] sm:$0xff]
      %v1646 = vld [vmem:[%s4] sm:$0x1]
      %v1648 = vlaneseq
      %v1649 = vshrl.u32 %v1648, 7
      %v1650 = vsub.s32 0, %v1649
      %v1651 = vrot.slane %v1646, %v1650
      %1653 = vmatprep.subr.mxu0 0.0
      %1654 = vmatpush1.msra.mxu0 %v1645
      %1655 = vmatprep.subr.mxu0 0.0
      %1656 = vmatpush1.msra.mxu0 %v1644
      %1657 = vmatprep.subr.mxu0 0.0
      %1658 = vmatpush1.msra.mxu0 %v1643
      %1659 = vmatprep.subr.mxu0 0.0
      %1660 = vmatpush1.msra.mxu0 %v1642
      %1661 = vmatprep.subr.mxu0 0.0
      %1662 = vmatpush1.msra.mxu0 %v1641
      %1663 = vmatprep.subr.mxu0 0.0
      %1664 = vmatpush1.msra.mxu0 %v1640
      %1665 = vmatprep.subr.mxu0 0.0
      %1666 = vmatpush1.msra.mxu0 %v1639
      %1667 = vmatprep.subr.mxu0 0.0
      %1668 = vmatpush1.msra.mxu0 %v1638
      %1669 = vmatprep.subr.mxu0 0.0
      %1670 = vmatpush1.msra.mxu0 %v1637
      %1671 = vmatprep.subr.mxu0 0.0
      %1672 = vmatpush1.msra.mxu0 %v1636
      %1673 = vmatprep.subr.mxu0 0.0
      %1674 = vmatpush1.msra.mxu0 %v1635
      %1675 = vmatprep.subr.mxu0 0.0
      %1676 = vmatpush1.msra.mxu0 %v1634
      %1677 = vmatprep.subr.mxu0 0.0
      %1678 = vmatpush1.msra.mxu0 %v1633
      %1679 = vmatprep.subr.mxu0 0.0
      %1680 = vmatpush1.msra.mxu0 %v1632
      %1681 = vmatprep.subr.mxu0 0.0
      %1682 = vmatpush1.msra.mxu0 %v1631
      %1683 = vmatprep.subr.mxu0 0.0
      %1684 = vmatpush1.msra.mxu0 %v1630
      %1685 = vmatprep.subr.mxu0 0.0
      %1686 = vmatpush2.msra.mxu0 0.0
      %1687 = vmatprep.subr.mxu0 0.0
      %1688 = vmatpush2.msra.mxu0 0.0
      %1689 = vmatprep.subr.mxu0 0.0
      %1690 = vmatpush2.msra.mxu0 0.0
      %1691 = vmatprep.subr.mxu0 0.0
      %1692 = vmatpush2.msra.mxu0 0.0
      %1693 = vmatprep.subr.mxu0 0.0
      %1694 = vmatpush2.msra.mxu0 0.0
      %1695 = vmatprep.subr.mxu0 0.0
      %1696 = vmatpush2.msra.mxu0 0.0
      %1697 = vmatprep.subr.mxu0 0.0
      %1698 = vmatpush2.msra.mxu0 0.0
      %1699 = vmatprep.subr.mxu0 0.0
      %1700 = vmatpush2.msra.mxu0 0.0
      %1701 = vmatprep.subr.mxu0 0.0
      %1702 = vmatpush2.msra.mxu0 0.0
      %1703 = vmatprep.subr.mxu0 0.0
      %1704 = vmatpush2.msra.mxu0 0.0
      %1705 = vmatprep.subr.mxu0 0.0
      %1706 = vmatpush2.msra.mxu0 0.0
      %1707 = vmatprep.subr.mxu0 0.0
      %1708 = vmatpush2.msra.mxu0 0.0
      %1709 = vmatprep.subr.mxu0 0.0
      %1710 = vmatpush2.msra.mxu0 0.0
      %1711 = vmatprep.subr.mxu0 0.0
      %1712 = vmatpush2.msra.mxu0 0.0
      %1713 = vmatprep.subr.mxu0 0.0
      %1714 = vmatpush2.msra.mxu0 0.0
      %1715 = vmatprep.subr.mxu0 0.0
      %1716 = vmatpush2.msra.mxu0 0.0
      %1717 = vmatprep.mubr.f32.mxu0 0.0
      %1718 = vmatmul.mubr.f32.gmra.mxu0 %v1622
      %v1719 = vpop.f32.mrf.mxu0
      %v1720 = vadd.f32 %v1651, %v1719
      %v1721 = vpop.f32.mrf.mxu0
      %1722 = vmatprep.mubr.f32.mxu0 0.0
      %1723 = vmatmul.mubr.f32.gmra.mxu0 %v1627
      %v1724 = vpop.f32.mrf.mxu0
      %v1725 = vadd.f32 %v1651, %v1724
      %v1726 = vpop.f32.mrf.mxu0
      %1727 = vdwg.mxu0
      %1728 = vst [vmem:[%s359] sm:$0xff] %v1720
      %1729 = vst [vmem:[%s359 + $0x8] sm:$0x3] %v1725
      %p1730 = scmp.lt.s32.totalorder %s21, 1
      %s1731 = scalar_select %p1730, %s21, 1
      %s1732 = smul.addr %s1731, 2
      %s1733 = smul.addr %s1732, 8
      %s1734 = scalar_lea.vmem %s10, %s1733
      // Predicated region
      $region61: #{multi_head_self_attention.1} parent=59 // pred_check
        %p1735 = pneg %p254
      $region62: #{multi_head_self_attention.1} parent=59 // pred_check_branch
        %1737 = sbr.rel (%p1735) target = $region64
      $region63: #{multi_head_self_attention.1} parent=59 // pred_region
        _
      $region64: #{multi_head_self_attention.1} parent=59 // pred_fallthru
        _
    $region60: #{multi_head_self_attention.1} parent=5 // pred_fallthru
      _
    %p1738 = scmp.le.s32.totalorder 2, %s16
    // Predicated region
    $region65: #{multi_head_self_attention.1} parent=5 // pred_check
      %p1739 = pneg %p1738
    $region66: #{multi_head_self_attention.1} parent=5 // pred_check_branch
      %1741 = sbr.rel (%p1739) target = $region68
    $region67: #{multi_head_self_attention.1} parent=5 // pred_region
      %s1742 = ssub.s32 %s16, 2
      // Predicated region
      $region69: #{multi_head_self_attention.1} parent=67 // pred_check
        %p1743 = pneg %p260
      $region70: #{multi_head_self_attention.1} parent=67 // pred_check_branch
        %1745 = sbr.rel (%p1743) target = $region72
      $region71: #{multi_head_self_attention.1} parent=67 // pred_region
        %p1746 = scmp.lt.s32.totalorder %s22, 1
        %s1747 = scalar_select %p1746, %s22, 1
        %s1748 = smul.addr %s1747, 2
        %s1749 = smul.addr %s1748, 8
        %s1750 = scalar_lea.vmem %s10, %s1749
      $region72: #{multi_head_self_attention.1} parent=67 // pred_fallthru
        _
    $region68: #{multi_head_self_attention.1} parent=5 // pred_fallthru
      _
  $region6: #{multi_head_self_attention.1} parent=0 // loop_footer
    %s20 = sadd.s32 1, %s16
  $region7: #{multi_head_self_attention.1} parent=0 // loop_footer_branch
    %15 = sbr.rel target = $region3
  $region8: #{multi_head_self_attention.1} parent=0 // loop_exit
    _

</llo_original>
